<compile_context>
chip_gen: v5e
topology: v5e:2x2
jax: 0.10.0
libtpu: 0.0.40
codegen_flags: <defaults>
</compile_context>

<pallas_src>
import functools

import numpy as np
import jax
import jax.numpy as jnp
from jax.experimental import pallas as pl
from jax.experimental.pallas import tpu as pltpu

KS = 7          # spatial-attention kernel size
PAD = 3         # padding for the 7x7 conv


def _spatial_attention_kernel(x_ref, wmask_ref, o_ref, sum_ref, max_ref, *,
                              C, W, HWp, block_b):
    """x_ref:     (block_b, block_c, HWp)  input block (native dtype)
       wmask_ref: (KS*KS, 2*block_b, HWp)  per-tap weight*validity masks (f32)
       o_ref:     (block_b, 1, HWp)        sigmoid(conv) output
       sum_ref / max_ref: (block_b, HWp)   f32 running channel-sum / channel-max
    """
    c_step = pl.program_id(1)
    last_c = pl.num_programs(1) - 1

    # Partial channel pooling for this C tile (whole batch block at once).
    xb = x_ref[...].astype(jnp.float32)            # (block_b, block_c, HWp)
    part_sum = jnp.sum(xb, axis=1)                 # (block_b, HWp)
    part_max = jnp.max(xb, axis=1)                 # (block_b, HWp)

    @pl.when(c_step == 0)
    def _():
        sum_ref[...] = part_sum
        max_ref[...] = part_max

    @pl.when(c_step > 0)
    def _():
        sum_ref[...] = sum_ref[...] + part_sum
        max_ref[...] = jnp.maximum(max_ref[...], part_max)

    @pl.when(c_step == last_c)
    def _():
        avg = sum_ref[...] * (1.0 / C)                           # (block_b, HWp)
        # Stack avg/max on sublanes: rows [0:block_b]=avg, [block_b:2b]=max.
        slab = jnp.concatenate([avg, max_ref[...]], axis=0)      # (2*block_b, HWp)

        # 7x7 conv, fully unrolled: one lane roll per tap, weight already folded
        # into the per-tap mask.  4 independent accumulators for ILP.
        n_acc = 4
        accs = [jnp.zeros_like(slab) for _ in range(n_acc)]
        for tap in range(KS * KS):
            di, dj = divmod(tap, KS)
            off = (di - PAD) * W + (dj - PAD)      # flat tap offset
            sh = (-off) % HWp
            shifted = slab if sh == 0 else pltpu.roll(slab, shift=sh, axis=1)
            accs[tap % n_acc] = accs[tap % n_acc] + wmask_ref[tap] * shifted

        acc = (accs[0] + accs[1]) + (accs[2] + accs[3])          # (2*block_b, HWp)
        conv = acc[:block_b] + acc[block_b:]                     # (block_b, HWp)

        # Sigmoid via tanh: one EUP op, no overflow corner.
        sa = 0.5 * (1.0 + jnp.tanh(0.5 * conv))
        o_ref[...] = sa[:, None, :].astype(o_ref.dtype)


def spatial_attention(x, conv_w, *, block_b=1, block_c=None,
                      vmem_limit_bytes=None):
    """x: (B, C, H, W) any float dtype; conv_w: (2, KS, KS) == conv1.weight of
    SpatialAttention ((1, 2, 7, 7) in PyTorch, squeezed).  Returns (B, 1, H, W)
    in x.dtype.

    block_b: batch tile.  Keep block_b <= B/2 on v7x (2 TCs); grow it on
             v5e/v6e to amortize per-step overhead.
    block_c: channel tile (must divide C; multiple of 8 if < C).  Tile C on
             v7x when block_b*C*HWp*bytes approaches the VMEM budget.
    """
    B, C, H, W = x.shape
    HW = H * W
    HWp = ((HW + 127) // 128) * 128                # lane-dense trailing dim
    if block_c is None:
        block_c = C
    assert B % block_b == 0, "block_b must divide B"
    assert C % block_c == 0, "block_c must divide C"

    # Keep the model's native dtype on the HBM wire; upcast happens in-kernel.
    x3 = x.reshape(B, C, HW)
    if HWp != HW:
        x3 = jnp.pad(x3, ((0, 0), (0, 0), (0, HWp - HW)))

    # --- static layout metadata: per-tap validity masks folded with weights ---
    pos = np.arange(HWp)
    row, col = pos // W, pos % W
    in_img = pos < HW
    masks = []
    for di in range(KS):
        for dj in range(KS):
            r = row + di - PAD
            c = col + dj - PAD
            masks.append((r >= 0) & (r < H) & (c >= 0) & (c < W) & in_img)
    mask_np = np.stack(masks).astype(np.float32)                 # (49, HWp)

    w_np = np.asarray(conv_w, np.float32).reshape(2, KS * KS)    # (2, 49)
    wm = w_np[:, :, None] * mask_np[None]                        # (2, 49, HWp)
    wm = np.repeat(wm, block_b, axis=0)                          # (2*block_b, 49, HWp)
    wmask = jnp.asarray(np.transpose(wm, (1, 0, 2)))             # (49, 2*block_b, HWp)

    kernel = functools.partial(_spatial_attention_kernel,
                               C=C, W=W, HWp=HWp, block_b=block_b)

    cp_kwargs = dict(dimension_semantics=("parallel", "arbitrary"))
    if vmem_limit_bytes is not None:
        cp_kwargs["vmem_limit_bytes"] = vmem_limit_bytes

    out3 = pl.pallas_call(
        kernel,
        out_shape=jax.ShapeDtypeStruct((B, 1, HWp), x.dtype),
        grid_spec=pltpu.PrefetchScalarGridSpec(
            num_scalar_prefetch=0,
            grid=(B // block_b, C // block_c),
            in_specs=[
                pl.BlockSpec((block_b, block_c, HWp), lambda b, c: (b, c, 0)),
                pl.BlockSpec((KS * KS, 2 * block_b, HWp), lambda b, c: (0, 0, 0)),
            ],
            out_specs=pl.BlockSpec((block_b, 1, HWp), lambda b, c: (b, 0, 0)),
            scratch_shapes=[pltpu.VMEM((block_b, HWp), jnp.float32),
                            pltpu.VMEM((block_b, HWp), jnp.float32)],
        ),
        compiler_params=pltpu.CompilerParams(**cp_kwargs),
    )(x3, wmask)

    return out3[:, :, :HW].reshape(B, 1, H, W)


def ref_spatial_attention(x, w):
    """Numpy reference matching the PyTorch SpatialAttention forward."""
    B, C, H, W = x.shape
    avg = x.mean(axis=1)
    mx = x.max(axis=1)
    maps = np.stack([avg, mx], axis=1)                          # (B, 2, H, W)
    mp = np.pad(maps, ((0, 0), (0, 0), (PAD, PAD), (PAD, PAD)))
    out = np.zeros((B, H, W), np.float32)
    for c in range(2):
        for di in range(KS):
            for dj in range(KS):
                out += w[c, di, dj] * mp[:, c, di:di + H, dj:dj + W]
    return (1.0 / (1.0 + np.exp(-out)))[:, None, :, :]


if __name__ == "__main__":
    B, C, H, W = 2, 32, 16, 16

    key = jax.random.PRNGKey(0)
    kx, kw = jax.random.split(key)
    x = jax.random.normal(kx, (B, C, H, W), jnp.float32)
    # conv1.weight: (1, 2, 7, 7) -> stored as (2, 7, 7), no bias
    conv_w = jax.random.normal(kw, (2, KS, KS), jnp.float32) * (
        1.0 / np.sqrt(2 * KS * KS))

    ref = ref_spatial_attention(np.asarray(x), np.asarray(conv_w))

    # f32, single C tile, block_b=1 (grid length 2 on the parallel batch axis).
    out = jax.block_until_ready(spatial_attention(x, conv_w))
    np.testing.assert_allclose(np.asarray(out), ref, rtol=2e-3, atol=2e-3)

    # bf16 on the HBM wire (f32 compute inside the kernel).
    x_bf16 = x.astype(jnp.bfloat16)
    out_bf = jax.block_until_ready(spatial_attention(x_bf16, conv_w))
    ref_bf = ref_spatial_attention(
        np.asarray(jnp.asarray(x_bf16, jnp.float32)), np.asarray(conv_w))
    np.testing.assert_allclose(np.asarray(jnp.asarray(out_bf, jnp.float32)),
                               ref_bf, rtol=3e-2, atol=3e-2)

    # C-tiled accumulator path + batch block > 1 (exercises the pl.when phases).
    out_ct = jax.block_until_ready(
        spatial_attention(x, conv_w, block_b=2, block_c=8))
    np.testing.assert_allclose(np.asarray(out_ct), ref, rtol=2e-3, atol=2e-3)

    print("KERNEL_OK")
</pallas_src>

<mosaic_0001>
module attributes {stable_mosaic.version = 11 : i64} {
  func.func @_spatial_attention_kernel(%arg0: i32, %arg1: i32, %arg2: memref<1x32x256xf32, #tpu.memory_space<vmem>>, %arg3: memref<49x2x256xf32, #tpu.memory_space<vmem>>, %arg4: memref<1x1x256xf32, #tpu.memory_space<vmem>>, %arg5: memref<1x256xf32, #tpu.memory_space<vmem>>, %arg6: memref<1x256xf32, #tpu.memory_space<vmem>>) attributes {dimension_semantics = [#tpu.dimension_semantics<parallel>, #tpu.dimension_semantics<arbitrary>], iteration_bounds = array<i64: 2, 1>, scalar_prefetch = 0 : i64, scratch_operands = 2 : i64, tpu.core_type = #tpu.core_type<tc>, window_params = [{transform_indices = @transform_0, window_bounds = array<i64: 1, 32, 256>}, {pipeline_mode = #tpu.pipeline_mode<synchronous>, transform_indices = @transform_1, window_bounds = array<i64: 49, 2, 256>}, {transform_indices = @transform_2, window_bounds = array<i64: 1, 1, 256>}]} {
    %c0 = arith.constant 0 : index
    %c0_0 = arith.constant 0 : index
    %c0_1 = arith.constant 0 : index
    %0 = vector.load %arg2[%c0, %c0_0, %c0_1] : memref<1x32x256xf32, #tpu.memory_space<vmem>>, vector<1x32x256xf32>
    %cst = arith.constant dense<0.000000e+00> : vector<1x256xf32>
    %1 = vector.multi_reduction <add>, %0, %cst [1] : vector<1x32x256xf32> to vector<1x256xf32>
    %cst_2 = arith.constant dense<0xFF800000> : vector<1x256xf32>
    %2 = vector.multi_reduction <maximumf>, %0, %cst_2 [1] : vector<1x32x256xf32> to vector<1x256xf32>
    %c0_i32 = arith.constant 0 : i32
    %3 = arith.cmpi eq, %arg1, %c0_i32 : i32
    %4 = arith.extui %3 : i1 to i32
    %c0_i32_3 = arith.constant 0 : i32
    %5 = arith.cmpi ne, %4, %c0_i32_3 : i32
    scf.if %5 {
      %c0_8 = arith.constant 0 : index
      %c0_9 = arith.constant 0 : index
      %12 = vector.load %arg5[%c0_8, %c0_9] : memref<1x256xf32, #tpu.memory_space<vmem>>, vector<1x256xf32>
      tpu.vector_store %arg5[%c0_8, %c0_9], %1 {strides = array<i32>} : memref<1x256xf32, #tpu.memory_space<vmem>>, vector<1x256xf32>,
      %c0_10 = arith.constant 0 : index
      %c0_11 = arith.constant 0 : index
      %13 = vector.load %arg6[%c0_10, %c0_11] : memref<1x256xf32, #tpu.memory_space<vmem>>, vector<1x256xf32>
      tpu.vector_store %arg6[%c0_10, %c0_11], %2 {strides = array<i32>} : memref<1x256xf32, #tpu.memory_space<vmem>>, vector<1x256xf32>,
    } else {
    }
    %c0_i32_4 = arith.constant 0 : i32
    %6 = arith.cmpi sgt, %arg1, %c0_i32_4 : i32
    %7 = arith.extui %6 : i1 to i32
    %c0_i32_5 = arith.constant 0 : i32
    %8 = arith.cmpi ne, %7, %c0_i32_5 : i32
    scf.if %8 {
      %c0_8 = arith.constant 0 : index
      %c0_9 = arith.constant 0 : index
      %12 = vector.load %arg5[%c0_8, %c0_9] : memref<1x256xf32, #tpu.memory_space<vmem>>, vector<1x256xf32>
      %13 = arith.addf %12, %1 : vector<1x256xf32>
      %c0_10 = arith.constant 0 : index
      %c0_11 = arith.constant 0 : index
      %14 = vector.load %arg5[%c0_10, %c0_11] : memref<1x256xf32, #tpu.memory_space<vmem>>, vector<1x256xf32>
      tpu.vector_store %arg5[%c0_10, %c0_11], %13 {strides = array<i32>} : memref<1x256xf32, #tpu.memory_space<vmem>>, vector<1x256xf32>,
      %c0_12 = arith.constant 0 : index
      %c0_13 = arith.constant 0 : index
      %15 = vector.load %arg6[%c0_12, %c0_13] : memref<1x256xf32, #tpu.memory_space<vmem>>, vector<1x256xf32>
      %16 = arith.maximumf %15, %2 : vector<1x256xf32>
      %c0_14 = arith.constant 0 : index
      %c0_15 = arith.constant 0 : index
      %17 = vector.load %arg6[%c0_14, %c0_15] : memref<1x256xf32, #tpu.memory_space<vmem>>, vector<1x256xf32>
      tpu.vector_store %arg6[%c0_14, %c0_15], %16 {strides = array<i32>} : memref<1x256xf32, #tpu.memory_space<vmem>>, vector<1x256xf32>,
    } else {
    }
    %c0_i32_6 = arith.constant 0 : i32
    %9 = arith.cmpi eq, %arg1, %c0_i32_6 : i32
    %10 = arith.extui %9 : i1 to i32
    %c0_i32_7 = arith.constant 0 : i32
    %11 = arith.cmpi ne, %10, %c0_i32_7 : i32
    scf.if %11 {
      %c0_8 = arith.constant 0 : index
      %c0_9 = arith.constant 0 : index
      %12 = vector.load %arg5[%c0_8, %c0_9] : memref<1x256xf32, #tpu.memory_space<vmem>>, vector<1x256xf32>
      %cst_10 = arith.constant 3.125000e-02 : f32
      %13 = vector.broadcast %cst_10 : f32 to vector<1x256xf32>
      %14 = arith.mulf %12, %13 : vector<1x256xf32>
      %c0_11 = arith.constant 0 : index
      %c0_12 = arith.constant 0 : index
      %15 = vector.load %arg6[%c0_11, %c0_12] : memref<1x256xf32, #tpu.memory_space<vmem>>, vector<1x256xf32>
      %16 = tpu.concatenate %14, %15 in 0 : vector<1x256xf32>, vector<1x256xf32> -> vector<2x256xf32>
      %cst_13 = arith.constant 0.000000e+00 : f32
      %17 = vector.broadcast %cst_13 : f32 to vector<2x256xf32>
      %cst_14 = arith.constant 0.000000e+00 : f32
      %18 = vector.broadcast %cst_14 : f32 to vector<2x256xf32>
      %cst_15 = arith.constant 0.000000e+00 : f32
      %19 = vector.broadcast %cst_15 : f32 to vector<2x256xf32>
      %cst_16 = arith.constant 0.000000e+00 : f32
      %20 = vector.broadcast %cst_16 : f32 to vector<2x256xf32>
      %c51_i32 = arith.constant 51 : i32
      %21 = tpu.dynamic_rotate %16 by %c51_i32 dim 1 : vector<2x256xf32>, i32 -> vector<2x256xf32>
      %c0_17 = arith.constant 0 : index
      %c0_18 = arith.constant 0 : index
      %c0_19 = arith.constant 0 : index
      %22 = vector.load %arg3[%c0_17, %c0_18, %c0_19] : memref<49x2x256xf32, #tpu.memory_space<vmem>>, vector<1x2x256xf32>
      %23 = vector.shape_cast %22 : vector<1x2x256xf32> to vector<2x256xf32>
      %24 = arith.mulf %23, %21 : vector<2x256xf32>
      %25 = arith.addf %17, %24 : vector<2x256xf32>
      %c50_i32 = arith.constant 50 : i32
      %26 = tpu.dynamic_rotate %16 by %c50_i32 dim 1 : vector<2x256xf32>, i32 -> vector<2x256xf32>
      %c1 = arith.constant 1 : index
      %c0_20 = arith.constant 0 : index
      %c0_21 = arith.constant 0 : index
      %27 = vector.load %arg3[%c1, %c0_20, %c0_21] : memref<49x2x256xf32, #tpu.memory_space<vmem>>, vector<1x2x256xf32>
      %28 = vector.shape_cast %27 : vector<1x2x256xf32> to vector<2x256xf32>
      %29 = arith.mulf %28, %26 : vector<2x256xf32>
      %30 = arith.addf %18, %29 : vector<2x256xf32>
      %c49_i32 = arith.constant 49 : i32
      %31 = tpu.dynamic_rotate %16 by %c49_i32 dim 1 : vector<2x256xf32>, i32 -> vector<2x256xf32>
      %c2 = arith.constant 2 : index
      %c0_22 = arith.constant 0 : index
      %c0_23 = arith.constant 0 : index
      %32 = vector.load %arg3[%c2, %c0_22, %c0_23] : memref<49x2x256xf32, #tpu.memory_space<vmem>>, vector<1x2x256xf32>
      %33 = vector.shape_cast %32 : vector<1x2x256xf32> to vector<2x256xf32>
      %34 = arith.mulf %33, %31 : vector<2x256xf32>
      %35 = arith.addf %19, %34 : vector<2x256xf32>
      %c48_i32 = arith.constant 48 : i32
      %36 = tpu.dynamic_rotate %16 by %c48_i32 dim 1 : vector<2x256xf32>, i32 -> vector<2x256xf32>
      %c3 = arith.constant 3 : index
      %c0_24 = arith.constant 0 : index
      %c0_25 = arith.constant 0 : index
      %37 = vector.load %arg3[%c3, %c0_24, %c0_25] : memref<49x2x256xf32, #tpu.memory_space<vmem>>, vector<1x2x256xf32>
      %38 = vector.shape_cast %37 : vector<1x2x256xf32> to vector<2x256xf32>
      %39 = arith.mulf %38, %36 : vector<2x256xf32>
      %40 = arith.addf %20, %39 : vector<2x256xf32>
      %c47_i32 = arith.constant 47 : i32
      %41 = tpu.dynamic_rotate %16 by %c47_i32 dim 1 : vector<2x256xf32>, i32 -> vector<2x256xf32>
      %c4 = arith.constant 4 : index
      %c0_26 = arith.constant 0 : index
      %c0_27 = arith.constant 0 : index
      %42 = vector.load %arg3[%c4, %c0_26, %c0_27] : memref<49x2x256xf32, #tpu.memory_space<vmem>>, vector<1x2x256xf32>
      %43 = vector.shape_cast %42 : vector<1x2x256xf32> to vector<2x256xf32>
      %44 = arith.mulf %43, %41 : vector<2x256xf32>
      %45 = arith.addf %25, %44 : vector<2x256xf32>
      %c46_i32 = arith.constant 46 : i32
      %46 = tpu.dynamic_rotate %16 by %c46_i32 dim 1 : vector<2x256xf32>, i32 -> vector<2x256xf32>
      %c5 = arith.constant 5 : index
      %c0_28 = arith.constant 0 : index
      %c0_29 = arith.constant 0 : index
      %47 = vector.load %arg3[%c5, %c0_28, %c0_29] : memref<49x2x256xf32, #tpu.memory_space<vmem>>, vector<1x2x256xf32>
      %48 = vector.shape_cast %47 : vector<1x2x256xf32> to vector<2x256xf32>
      %49 = arith.mulf %48, %46 : vector<2x256xf32>
      %50 = arith.addf %30, %49 : vector<2x256xf32>
      %c45_i32 = arith.constant 45 : i32
      %51 = tpu.dynamic_rotate %16 by %c45_i32 dim 1 : vector<2x256xf32>, i32 -> vector<2x256xf32>
      %c6 = arith.constant 6 : index
      %c0_30 = arith.constant 0 : index
      %c0_31 = arith.constant 0 : index
      %52 = vector.load %arg3[%c6, %c0_30, %c0_31] : memref<49x2x256xf32, #tpu.memory_space<vmem>>, vector<1x2x256xf32>
      %53 = vector.shape_cast %52 : vector<1x2x256xf32> to vector<2x256xf32>
      %54 = arith.mulf %53, %51 : vector<2x256xf32>
      %55 = arith.addf %35, %54 : vector<2x256xf32>
      %c35_i32 = arith.constant 35 : i32
      %56 = tpu.dynamic_rotate %16 by %c35_i32 dim 1 : vector<2x256xf32>, i32 -> vector<2x256xf32>
      %c7 = arith.constant 7 : index
      %c0_32 = arith.constant 0 : index
      %c0_33 = arith.constant 0 : index
      %57 = vector.load %arg3[%c7, %c0_32, %c0_33] : memref<49x2x256xf32, #tpu.memory_space<vmem>>, vector<1x2x256xf32>
      %58 = vector.shape_cast %57 : vector<1x2x256xf32> to vector<2x256xf32>
      %59 = arith.mulf %58, %56 : vector<2x256xf32>
      %60 = arith.addf %40, %59 : vector<2x256xf32>
      %c34_i32 = arith.constant 34 : i32
      %61 = tpu.dynamic_rotate %16 by %c34_i32 dim 1 : vector<2x256xf32>, i32 -> vector<2x256xf32>
      %c8 = arith.constant 8 : index
      %c0_34 = arith.constant 0 : index
      %c0_35 = arith.constant 0 : index
      %62 = vector.load %arg3[%c8, %c0_34, %c0_35] : memref<49x2x256xf32, #tpu.memory_space<vmem>>, vector<1x2x256xf32>
      %63 = vector.shape_cast %62 : vector<1x2x256xf32> to vector<2x256xf32>
      %64 = arith.mulf %63, %61 : vector<2x256xf32>
      %65 = arith.addf %45, %64 : vector<2x256xf32>
      %c33_i32 = arith.constant 33 : i32
      %66 = tpu.dynamic_rotate %16 by %c33_i32 dim 1 : vector<2x256xf32>, i32 -> vector<2x256xf32>
      %c9 = arith.constant 9 : index
      %c0_36 = arith.constant 0 : index
      %c0_37 = arith.constant 0 : index
      %67 = vector.load %arg3[%c9, %c0_36, %c0_37] : memref<49x2x256xf32, #tpu.memory_space<vmem>>, vector<1x2x256xf32>
      %68 = vector.shape_cast %67 : vector<1x2x256xf32> to vector<2x256xf32>
      %69 = arith.mulf %68, %66 : vector<2x256xf32>
      %70 = arith.addf %50, %69 : vector<2x256xf32>
      %c32_i32 = arith.constant 32 : i32
      %71 = tpu.dynamic_rotate %16 by %c32_i32 dim 1 : vector<2x256xf32>, i32 -> vector<2x256xf32>
      %c10 = arith.constant 10 : index
      %c0_38 = arith.constant 0 : index
      %c0_39 = arith.constant 0 : index
      %72 = vector.load %arg3[%c10, %c0_38, %c0_39] : memref<49x2x256xf32, #tpu.memory_space<vmem>>, vector<1x2x256xf32>
      %73 = vector.shape_cast %72 : vector<1x2x256xf32> to vector<2x256xf32>
      %74 = arith.mulf %73, %71 : vector<2x256xf32>
      %75 = arith.addf %55, %74 : vector<2x256xf32>
      %c31_i32 = arith.constant 31 : i32
      %76 = tpu.dynamic_rotate %16 by %c31_i32 dim 1 : vector<2x256xf32>, i32 -> vector<2x256xf32>
      %c11 = arith.constant 11 : index
      %c0_40 = arith.constant 0 : index
      %c0_41 = arith.constant 0 : index
      %77 = vector.load %arg3[%c11, %c0_40, %c0_41] : memref<49x2x256xf32, #tpu.memory_space<vmem>>, vector<1x2x256xf32>
      %78 = vector.shape_cast %77 : vector<1x2x256xf32> to vector<2x256xf32>
      %79 = arith.mulf %78, %76 : vector<2x256xf32>
      %80 = arith.addf %60, %79 : vector<2x256xf32>
      %c30_i32 = arith.constant 30 : i32
      %81 = tpu.dynamic_rotate %16 by %c30_i32 dim 1 : vector<2x256xf32>, i32 -> vector<2x256xf32>
      %c12 = arith.constant 12 : index
      %c0_42 = arith.constant 0 : index
      %c0_43 = arith.constant 0 : index
      %82 = vector.load %arg3[%c12, %c0_42, %c0_43] : memref<49x2x256xf32, #tpu.memory_space<vmem>>, vector<1x2x256xf32>
      %83 = vector.shape_cast %82 : vector<1x2x256xf32> to vector<2x256xf32>
      %84 = arith.mulf %83, %81 : vector<2x256xf32>
      %85 = arith.addf %65, %84 : vector<2x256xf32>
      %c29_i32 = arith.constant 29 : i32
      %86 = tpu.dynamic_rotate %16 by %c29_i32 dim 1 : vector<2x256xf32>, i32 -> vector<2x256xf32>
      %c13 = arith.constant 13 : index
      %c0_44 = arith.constant 0 : index
      %c0_45 = arith.constant 0 : index
      %87 = vector.load %arg3[%c13, %c0_44, %c0_45] : memref<49x2x256xf32, #tpu.memory_space<vmem>>, vector<1x2x256xf32>
      %88 = vector.shape_cast %87 : vector<1x2x256xf32> to vector<2x256xf32>
      %89 = arith.mulf %88, %86 : vector<2x256xf32>
      %90 = arith.addf %70, %89 : vector<2x256xf32>
      %c19_i32 = arith.constant 19 : i32
      %91 = tpu.dynamic_rotate %16 by %c19_i32 dim 1 : vector<2x256xf32>, i32 -> vector<2x256xf32>
      %c14 = arith.constant 14 : index
      %c0_46 = arith.constant 0 : index
      %c0_47 = arith.constant 0 : index
      %92 = vector.load %arg3[%c14, %c0_46, %c0_47] : memref<49x2x256xf32, #tpu.memory_space<vmem>>, vector<1x2x256xf32>
      %93 = vector.shape_cast %92 : vector<1x2x256xf32> to vector<2x256xf32>
      %94 = arith.mulf %93, %91 : vector<2x256xf32>
      %95 = arith.addf %75, %94 : vector<2x256xf32>
      %c18_i32 = arith.constant 18 : i32
      %96 = tpu.dynamic_rotate %16 by %c18_i32 dim 1 : vector<2x256xf32>, i32 -> vector<2x256xf32>
      %c15 = arith.constant 15 : index
      %c0_48 = arith.constant 0 : index
      %c0_49 = arith.constant 0 : index
      %97 = vector.load %arg3[%c15, %c0_48, %c0_49] : memref<49x2x256xf32, #tpu.memory_space<vmem>>, vector<1x2x256xf32>
      %98 = vector.shape_cast %97 : vector<1x2x256xf32> to vector<2x256xf32>
      %99 = arith.mulf %98, %96 : vector<2x256xf32>
      %100 = arith.addf %80, %99 : vector<2x256xf32>
      %c17_i32 = arith.constant 17 : i32
      %101 = tpu.dynamic_rotate %16 by %c17_i32 dim 1 : vector<2x256xf32>, i32 -> vector<2x256xf32>
      %c16 = arith.constant 16 : index
      %c0_50 = arith.constant 0 : index
      %c0_51 = arith.constant 0 : index
      %102 = vector.load %arg3[%c16, %c0_50, %c0_51] : memref<49x2x256xf32, #tpu.memory_space<vmem>>, vector<1x2x256xf32>
      %103 = vector.shape_cast %102 : vector<1x2x256xf32> to vector<2x256xf32>
      %104 = arith.mulf %103, %101 : vector<2x256xf32>
      %105 = arith.addf %85, %104 : vector<2x256xf32>
      %c16_i32 = arith.constant 16 : i32
      %106 = tpu.dynamic_rotate %16 by %c16_i32 dim 1 : vector<2x256xf32>, i32 -> vector<2x256xf32>
      %c17 = arith.constant 17 : index
      %c0_52 = arith.constant 0 : index
      %c0_53 = arith.constant 0 : index
      %107 = vector.load %arg3[%c17, %c0_52, %c0_53] : memref<49x2x256xf32, #tpu.memory_space<vmem>>, vector<1x2x256xf32>
      %108 = vector.shape_cast %107 : vector<1x2x256xf32> to vector<2x256xf32>
      %109 = arith.mulf %108, %106 : vector<2x256xf32>
      %110 = arith.addf %90, %109 : vector<2x256xf32>
      %c15_i32 = arith.constant 15 : i32
      %111 = tpu.dynamic_rotate %16 by %c15_i32 dim 1 : vector<2x256xf32>, i32 -> vector<2x256xf32>
      %c18 = arith.constant 18 : index
      %c0_54 = arith.constant 0 : index
      %c0_55 = arith.constant 0 : index
      %112 = vector.load %arg3[%c18, %c0_54, %c0_55] : memref<49x2x256xf32, #tpu.memory_space<vmem>>, vector<1x2x256xf32>
      %113 = vector.shape_cast %112 : vector<1x2x256xf32> to vector<2x256xf32>
      %114 = arith.mulf %113, %111 : vector<2x256xf32>
      %115 = arith.addf %95, %114 : vector<2x256xf32>
      %c14_i32 = arith.constant 14 : i32
      %116 = tpu.dynamic_rotate %16 by %c14_i32 dim 1 : vector<2x256xf32>, i32 -> vector<2x256xf32>
      %c19 = arith.constant 19 : index
      %c0_56 = arith.constant 0 : index
      %c0_57 = arith.constant 0 : index
      %117 = vector.load %arg3[%c19, %c0_56, %c0_57] : memref<49x2x256xf32, #tpu.memory_space<vmem>>, vector<1x2x256xf32>
      %118 = vector.shape_cast %117 : vector<1x2x256xf32> to vector<2x256xf32>
      %119 = arith.mulf %118, %116 : vector<2x256xf32>
      %120 = arith.addf %100, %119 : vector<2x256xf32>
      %c13_i32 = arith.constant 13 : i32
      %121 = tpu.dynamic_rotate %16 by %c13_i32 dim 1 : vector<2x256xf32>, i32 -> vector<2x256xf32>
      %c20 = arith.constant 20 : index
      %c0_58 = arith.constant 0 : index
      %c0_59 = arith.constant 0 : index
      %122 = vector.load %arg3[%c20, %c0_58, %c0_59] : memref<49x2x256xf32, #tpu.memory_space<vmem>>, vector<1x2x256xf32>
      %123 = vector.shape_cast %122 : vector<1x2x256xf32> to vector<2x256xf32>
      %124 = arith.mulf %123, %121 : vector<2x256xf32>
      %125 = arith.addf %105, %124 : vector<2x256xf32>
      %c3_i32 = arith.constant 3 : i32
      %126 = tpu.dynamic_rotate %16 by %c3_i32 dim 1 : vector<2x256xf32>, i32 -> vector<2x256xf32>
      %c21 = arith.constant 21 : index
      %c0_60 = arith.constant 0 : index
      %c0_61 = arith.constant 0 : index
      %127 = vector.load %arg3[%c21, %c0_60, %c0_61] : memref<49x2x256xf32, #tpu.memory_space<vmem>>, vector<1x2x256xf32>
      %128 = vector.shape_cast %127 : vector<1x2x256xf32> to vector<2x256xf32>
      %129 = arith.mulf %128, %126 : vector<2x256xf32>
      %130 = arith.addf %110, %129 : vector<2x256xf32>
      %c2_i32 = arith.constant 2 : i32
      %131 = tpu.dynamic_rotate %16 by %c2_i32 dim 1 : vector<2x256xf32>, i32 -> vector<2x256xf32>
      %c22 = arith.constant 22 : index
      %c0_62 = arith.constant 0 : index
      %c0_63 = arith.constant 0 : index
      %132 = vector.load %arg3[%c22, %c0_62, %c0_63] : memref<49x2x256xf32, #tpu.memory_space<vmem>>, vector<1x2x256xf32>
      %133 = vector.shape_cast %132 : vector<1x2x256xf32> to vector<2x256xf32>
      %134 = arith.mulf %133, %131 : vector<2x256xf32>
      %135 = arith.addf %115, %134 : vector<2x256xf32>
      %c1_i32 = arith.constant 1 : i32
      %136 = tpu.dynamic_rotate %16 by %c1_i32 dim 1 : vector<2x256xf32>, i32 -> vector<2x256xf32>
      %c23 = arith.constant 23 : index
      %c0_64 = arith.constant 0 : index
      %c0_65 = arith.constant 0 : index
      %137 = vector.load %arg3[%c23, %c0_64, %c0_65] : memref<49x2x256xf32, #tpu.memory_space<vmem>>, vector<1x2x256xf32>
      %138 = vector.shape_cast %137 : vector<1x2x256xf32> to vector<2x256xf32>
      %139 = arith.mulf %138, %136 : vector<2x256xf32>
      %140 = arith.addf %120, %139 : vector<2x256xf32>
      %c24 = arith.constant 24 : index
      %c0_66 = arith.constant 0 : index
      %c0_67 = arith.constant 0 : index
      %141 = vector.load %arg3[%c24, %c0_66, %c0_67] : memref<49x2x256xf32, #tpu.memory_space<vmem>>, vector<1x2x256xf32>
      %142 = vector.shape_cast %141 : vector<1x2x256xf32> to vector<2x256xf32>
      %143 = arith.mulf %142, %16 : vector<2x256xf32>
      %144 = arith.addf %125, %143 : vector<2x256xf32>
      %c255_i32 = arith.constant 255 : i32
      %145 = tpu.dynamic_rotate %16 by %c255_i32 dim 1 : vector<2x256xf32>, i32 -> vector<2x256xf32>
      %c25 = arith.constant 25 : index
      %c0_68 = arith.constant 0 : index
      %c0_69 = arith.constant 0 : index
      %146 = vector.load %arg3[%c25, %c0_68, %c0_69] : memref<49x2x256xf32, #tpu.memory_space<vmem>>, vector<1x2x256xf32>
      %147 = vector.shape_cast %146 : vector<1x2x256xf32> to vector<2x256xf32>
      %148 = arith.mulf %147, %145 : vector<2x256xf32>
      %149 = arith.addf %130, %148 : vector<2x256xf32>
      %c254_i32 = arith.constant 254 : i32
      %150 = tpu.dynamic_rotate %16 by %c254_i32 dim 1 : vector<2x256xf32>, i32 -> vector<2x256xf32>
      %c26 = arith.constant 26 : index
      %c0_70 = arith.constant 0 : index
      %c0_71 = arith.constant 0 : index
      %151 = vector.load %arg3[%c26, %c0_70, %c0_71] : memref<49x2x256xf32, #tpu.memory_space<vmem>>, vector<1x2x256xf32>
      %152 = vector.shape_cast %151 : vector<1x2x256xf32> to vector<2x256xf32>
      %153 = arith.mulf %152, %150 : vector<2x256xf32>
      %154 = arith.addf %135, %153 : vector<2x256xf32>
      %c253_i32 = arith.constant 253 : i32
      %155 = tpu.dynamic_rotate %16 by %c253_i32 dim 1 : vector<2x256xf32>, i32 -> vector<2x256xf32>
      %c27 = arith.constant 27 : index
      %c0_72 = arith.constant 0 : index
      %c0_73 = arith.constant 0 : index
      %156 = vector.load %arg3[%c27, %c0_72, %c0_73] : memref<49x2x256xf32, #tpu.memory_space<vmem>>, vector<1x2x256xf32>
      %157 = vector.shape_cast %156 : vector<1x2x256xf32> to vector<2x256xf32>
      %158 = arith.mulf %157, %155 : vector<2x256xf32>
      %159 = arith.addf %140, %158 : vector<2x256xf32>
      %c243_i32 = arith.constant 243 : i32
      %160 = tpu.dynamic_rotate %16 by %c243_i32 dim 1 : vector<2x256xf32>, i32 -> vector<2x256xf32>
      %c28 = arith.constant 28 : index
      %c0_74 = arith.constant 0 : index
      %c0_75 = arith.constant 0 : index
      %161 = vector.load %arg3[%c28, %c0_74, %c0_75] : memref<49x2x256xf32, #tpu.memory_space<vmem>>, vector<1x2x256xf32>
      %162 = vector.shape_cast %161 : vector<1x2x256xf32> to vector<2x256xf32>
      %163 = arith.mulf %162, %160 : vector<2x256xf32>
      %164 = arith.addf %144, %163 : vector<2x256xf32>
      %c242_i32 = arith.constant 242 : i32
      %165 = tpu.dynamic_rotate %16 by %c242_i32 dim 1 : vector<2x256xf32>, i32 -> vector<2x256xf32>
      %c29 = arith.constant 29 : index
      %c0_76 = arith.constant 0 : index
      %c0_77 = arith.constant 0 : index
      %166 = vector.load %arg3[%c29, %c0_76, %c0_77] : memref<49x2x256xf32, #tpu.memory_space<vmem>>, vector<1x2x256xf32>
      %167 = vector.shape_cast %166 : vector<1x2x256xf32> to vector<2x256xf32>
      %168 = arith.mulf %167, %165 : vector<2x256xf32>
      %169 = arith.addf %149, %168 : vector<2x256xf32>
      %c241_i32 = arith.constant 241 : i32
      %170 = tpu.dynamic_rotate %16 by %c241_i32 dim 1 : vector<2x256xf32>, i32 -> vector<2x256xf32>
      %c30 = arith.constant 30 : index
      %c0_78 = arith.constant 0 : index
      %c0_79 = arith.constant 0 : index
      %171 = vector.load %arg3[%c30, %c0_78, %c0_79] : memref<49x2x256xf32, #tpu.memory_space<vmem>>, vector<1x2x256xf32>
      %172 = vector.shape_cast %171 : vector<1x2x256xf32> to vector<2x256xf32>
      %173 = arith.mulf %172, %170 : vector<2x256xf32>
      %174 = arith.addf %154, %173 : vector<2x256xf32>
      %c240_i32 = arith.constant 240 : i32
      %175 = tpu.dynamic_rotate %16 by %c240_i32 dim 1 : vector<2x256xf32>, i32 -> vector<2x256xf32>
      %c31 = arith.constant 31 : index
      %c0_80 = arith.constant 0 : index
      %c0_81 = arith.constant 0 : index
      %176 = vector.load %arg3[%c31, %c0_80, %c0_81] : memref<49x2x256xf32, #tpu.memory_space<vmem>>, vector<1x2x256xf32>
      %177 = vector.shape_cast %176 : vector<1x2x256xf32> to vector<2x256xf32>
      %178 = arith.mulf %177, %175 : vector<2x256xf32>
      %179 = arith.addf %159, %178 : vector<2x256xf32>
      %c239_i32 = arith.constant 239 : i32
      %180 = tpu.dynamic_rotate %16 by %c239_i32 dim 1 : vector<2x256xf32>, i32 -> vector<2x256xf32>
      %c32 = arith.constant 32 : index
      %c0_82 = arith.constant 0 : index
      %c0_83 = arith.constant 0 : index
      %181 = vector.load %arg3[%c32, %c0_82, %c0_83] : memref<49x2x256xf32, #tpu.memory_space<vmem>>, vector<1x2x256xf32>
      %182 = vector.shape_cast %181 : vector<1x2x256xf32> to vector<2x256xf32>
      %183 = arith.mulf %182, %180 : vector<2x256xf32>
      %184 = arith.addf %164, %183 : vector<2x256xf32>
      %c238_i32 = arith.constant 238 : i32
      %185 = tpu.dynamic_rotate %16 by %c238_i32 dim 1 : vector<2x256xf32>, i32 -> vector<2x256xf32>
      %c33 = arith.constant 33 : index
      %c0_84 = arith.constant 0 : index
      %c0_85 = arith.constant 0 : index
      %186 = vector.load %arg3[%c33, %c0_84, %c0_85] : memref<49x2x256xf32, #tpu.memory_space<vmem>>, vector<1x2x256xf32>
      %187 = vector.shape_cast %186 : vector<1x2x256xf32> to vector<2x256xf32>
      %188 = arith.mulf %187, %185 : vector<2x256xf32>
      %189 = arith.addf %169, %188 : vector<2x256xf32>
      %c237_i32 = arith.constant 237 : i32
      %190 = tpu.dynamic_rotate %16 by %c237_i32 dim 1 : vector<2x256xf32>, i32 -> vector<2x256xf32>
      %c34 = arith.constant 34 : index
      %c0_86 = arith.constant 0 : index
      %c0_87 = arith.constant 0 : index
      %191 = vector.load %arg3[%c34, %c0_86, %c0_87] : memref<49x2x256xf32, #tpu.memory_space<vmem>>, vector<1x2x256xf32>
      %192 = vector.shape_cast %191 : vector<1x2x256xf32> to vector<2x256xf32>
      %193 = arith.mulf %192, %190 : vector<2x256xf32>
      %194 = arith.addf %174, %193 : vector<2x256xf32>
      %c227_i32 = arith.constant 227 : i32
      %195 = tpu.dynamic_rotate %16 by %c227_i32 dim 1 : vector<2x256xf32>, i32 -> vector<2x256xf32>
      %c35 = arith.constant 35 : index
      %c0_88 = arith.constant 0 : index
      %c0_89 = arith.constant 0 : index
      %196 = vector.load %arg3[%c35, %c0_88, %c0_89] : memref<49x2x256xf32, #tpu.memory_space<vmem>>, vector<1x2x256xf32>
      %197 = vector.shape_cast %196 : vector<1x2x256xf32> to vector<2x256xf32>
      %198 = arith.mulf %197, %195 : vector<2x256xf32>
      %199 = arith.addf %179, %198 : vector<2x256xf32>
      %c226_i32 = arith.constant 226 : i32
      %200 = tpu.dynamic_rotate %16 by %c226_i32 dim 1 : vector<2x256xf32>, i32 -> vector<2x256xf32>
      %c36 = arith.constant 36 : index
      %c0_90 = arith.constant 0 : index
      %c0_91 = arith.constant 0 : index
      %201 = vector.load %arg3[%c36, %c0_90, %c0_91] : memref<49x2x256xf32, #tpu.memory_space<vmem>>, vector<1x2x256xf32>
      %202 = vector.shape_cast %201 : vector<1x2x256xf32> to vector<2x256xf32>
      %203 = arith.mulf %202, %200 : vector<2x256xf32>
      %204 = arith.addf %184, %203 : vector<2x256xf32>
      %c225_i32 = arith.constant 225 : i32
      %205 = tpu.dynamic_rotate %16 by %c225_i32 dim 1 : vector<2x256xf32>, i32 -> vector<2x256xf32>
      %c37 = arith.constant 37 : index
      %c0_92 = arith.constant 0 : index
      %c0_93 = arith.constant 0 : index
      %206 = vector.load %arg3[%c37, %c0_92, %c0_93] : memref<49x2x256xf32, #tpu.memory_space<vmem>>, vector<1x2x256xf32>
      %207 = vector.shape_cast %206 : vector<1x2x256xf32> to vector<2x256xf32>
      %208 = arith.mulf %207, %205 : vector<2x256xf32>
      %209 = arith.addf %189, %208 : vector<2x256xf32>
      %c224_i32 = arith.constant 224 : i32
      %210 = tpu.dynamic_rotate %16 by %c224_i32 dim 1 : vector<2x256xf32>, i32 -> vector<2x256xf32>
      %c38 = arith.constant 38 : index
      %c0_94 = arith.constant 0 : index
      %c0_95 = arith.constant 0 : index
      %211 = vector.load %arg3[%c38, %c0_94, %c0_95] : memref<49x2x256xf32, #tpu.memory_space<vmem>>, vector<1x2x256xf32>
      %212 = vector.shape_cast %211 : vector<1x2x256xf32> to vector<2x256xf32>
      %213 = arith.mulf %212, %210 : vector<2x256xf32>
      %214 = arith.addf %194, %213 : vector<2x256xf32>
      %c223_i32 = arith.constant 223 : i32
      %215 = tpu.dynamic_rotate %16 by %c223_i32 dim 1 : vector<2x256xf32>, i32 -> vector<2x256xf32>
      %c39 = arith.constant 39 : index
      %c0_96 = arith.constant 0 : index
      %c0_97 = arith.constant 0 : index
      %216 = vector.load %arg3[%c39, %c0_96, %c0_97] : memref<49x2x256xf32, #tpu.memory_space<vmem>>, vector<1x2x256xf32>
      %217 = vector.shape_cast %216 : vector<1x2x256xf32> to vector<2x256xf32>
      %218 = arith.mulf %217, %215 : vector<2x256xf32>
      %219 = arith.addf %199, %218 : vector<2x256xf32>
      %c222_i32 = arith.constant 222 : i32
      %220 = tpu.dynamic_rotate %16 by %c222_i32 dim 1 : vector<2x256xf32>, i32 -> vector<2x256xf32>
      %c40 = arith.constant 40 : index
      %c0_98 = arith.constant 0 : index
      %c0_99 = arith.constant 0 : index
      %221 = vector.load %arg3[%c40, %c0_98, %c0_99] : memref<49x2x256xf32, #tpu.memory_space<vmem>>, vector<1x2x256xf32>
      %222 = vector.shape_cast %221 : vector<1x2x256xf32> to vector<2x256xf32>
      %223 = arith.mulf %222, %220 : vector<2x256xf32>
      %224 = arith.addf %204, %223 : vector<2x256xf32>
      %c221_i32 = arith.constant 221 : i32
      %225 = tpu.dynamic_rotate %16 by %c221_i32 dim 1 : vector<2x256xf32>, i32 -> vector<2x256xf32>
      %c41 = arith.constant 41 : index
      %c0_100 = arith.constant 0 : index
      %c0_101 = arith.constant 0 : index
      %226 = vector.load %arg3[%c41, %c0_100, %c0_101] : memref<49x2x256xf32, #tpu.memory_space<vmem>>, vector<1x2x256xf32>
      %227 = vector.shape_cast %226 : vector<1x2x256xf32> to vector<2x256xf32>
      %228 = arith.mulf %227, %225 : vector<2x256xf32>
      %229 = arith.addf %209, %228 : vector<2x256xf32>
      %c211_i32 = arith.constant 211 : i32
      %230 = tpu.dynamic_rotate %16 by %c211_i32 dim 1 : vector<2x256xf32>, i32 -> vector<2x256xf32>
      %c42 = arith.constant 42 : index
      %c0_102 = arith.constant 0 : index
      %c0_103 = arith.constant 0 : index
      %231 = vector.load %arg3[%c42, %c0_102, %c0_103] : memref<49x2x256xf32, #tpu.memory_space<vmem>>, vector<1x2x256xf32>
      %232 = vector.shape_cast %231 : vector<1x2x256xf32> to vector<2x256xf32>
      %233 = arith.mulf %232, %230 : vector<2x256xf32>
      %234 = arith.addf %214, %233 : vector<2x256xf32>
      %c210_i32 = arith.constant 210 : i32
      %235 = tpu.dynamic_rotate %16 by %c210_i32 dim 1 : vector<2x256xf32>, i32 -> vector<2x256xf32>
      %c43 = arith.constant 43 : index
      %c0_104 = arith.constant 0 : index
      %c0_105 = arith.constant 0 : index
      %236 = vector.load %arg3[%c43, %c0_104, %c0_105] : memref<49x2x256xf32, #tpu.memory_space<vmem>>, vector<1x2x256xf32>
      %237 = vector.shape_cast %236 : vector<1x2x256xf32> to vector<2x256xf32>
      %238 = arith.mulf %237, %235 : vector<2x256xf32>
      %239 = arith.addf %219, %238 : vector<2x256xf32>
      %c209_i32 = arith.constant 209 : i32
      %240 = tpu.dynamic_rotate %16 by %c209_i32 dim 1 : vector<2x256xf32>, i32 -> vector<2x256xf32>
      %c44 = arith.constant 44 : index
      %c0_106 = arith.constant 0 : index
      %c0_107 = arith.constant 0 : index
      %241 = vector.load %arg3[%c44, %c0_106, %c0_107] : memref<49x2x256xf32, #tpu.memory_space<vmem>>, vector<1x2x256xf32>
      %242 = vector.shape_cast %241 : vector<1x2x256xf32> to vector<2x256xf32>
      %243 = arith.mulf %242, %240 : vector<2x256xf32>
      %244 = arith.addf %224, %243 : vector<2x256xf32>
      %c208_i32 = arith.constant 208 : i32
      %245 = tpu.dynamic_rotate %16 by %c208_i32 dim 1 : vector<2x256xf32>, i32 -> vector<2x256xf32>
      %c45 = arith.constant 45 : index
      %c0_108 = arith.constant 0 : index
      %c0_109 = arith.constant 0 : index
      %246 = vector.load %arg3[%c45, %c0_108, %c0_109] : memref<49x2x256xf32, #tpu.memory_space<vmem>>, vector<1x2x256xf32>
      %247 = vector.shape_cast %246 : vector<1x2x256xf32> to vector<2x256xf32>
      %248 = arith.mulf %247, %245 : vector<2x256xf32>
      %249 = arith.addf %229, %248 : vector<2x256xf32>
      %c207_i32 = arith.constant 207 : i32
      %250 = tpu.dynamic_rotate %16 by %c207_i32 dim 1 : vector<2x256xf32>, i32 -> vector<2x256xf32>
      %c46 = arith.constant 46 : index
      %c0_110 = arith.constant 0 : index
      %c0_111 = arith.constant 0 : index
      %251 = vector.load %arg3[%c46, %c0_110, %c0_111] : memref<49x2x256xf32, #tpu.memory_space<vmem>>, vector<1x2x256xf32>
      %252 = vector.shape_cast %251 : vector<1x2x256xf32> to vector<2x256xf32>
      %253 = arith.mulf %252, %250 : vector<2x256xf32>
      %254 = arith.addf %234, %253 : vector<2x256xf32>
      %c206_i32 = arith.constant 206 : i32
      %255 = tpu.dynamic_rotate %16 by %c206_i32 dim 1 : vector<2x256xf32>, i32 -> vector<2x256xf32>
      %c47 = arith.constant 47 : index
      %c0_112 = arith.constant 0 : index
      %c0_113 = arith.constant 0 : index
      %256 = vector.load %arg3[%c47, %c0_112, %c0_113] : memref<49x2x256xf32, #tpu.memory_space<vmem>>, vector<1x2x256xf32>
      %257 = vector.shape_cast %256 : vector<1x2x256xf32> to vector<2x256xf32>
      %258 = arith.mulf %257, %255 : vector<2x256xf32>
      %259 = arith.addf %239, %258 : vector<2x256xf32>
      %c205_i32 = arith.constant 205 : i32
      %260 = tpu.dynamic_rotate %16 by %c205_i32 dim 1 : vector<2x256xf32>, i32 -> vector<2x256xf32>
      %c48 = arith.constant 48 : index
      %c0_114 = arith.constant 0 : index
      %c0_115 = arith.constant 0 : index
      %261 = vector.load %arg3[%c48, %c0_114, %c0_115] : memref<49x2x256xf32, #tpu.memory_space<vmem>>, vector<1x2x256xf32>
      %262 = vector.shape_cast %261 : vector<1x2x256xf32> to vector<2x256xf32>
      %263 = arith.mulf %262, %260 : vector<2x256xf32>
      %264 = arith.addf %244, %263 : vector<2x256xf32>
      %265 = arith.addf %264, %249 : vector<2x256xf32>
      %266 = arith.addf %254, %259 : vector<2x256xf32>
      %267 = arith.addf %265, %266 : vector<2x256xf32>
      %268 = vector.extract_strided_slice %267 {offsets = [0, 0], sizes = [1, 256], strides = [1, 1]} : vector<2x256xf32> to vector<1x256xf32>
      %269 = vector.extract_strided_slice %267 {offsets = [1, 0], sizes = [1, 256], strides = [1, 1]} : vector<2x256xf32> to vector<1x256xf32>
      %270 = arith.addf %268, %269 : vector<1x256xf32>
      %cst_116 = arith.constant 5.000000e-01 : f32
      %271 = vector.broadcast %cst_116 : f32 to vector<1x256xf32>
      %272 = arith.mulf %271, %270 : vector<1x256xf32>
      %273 = math.tanh %272 : vector<1x256xf32>
      %cst_117 = arith.constant 1.000000e+00 : f32
      %274 = vector.broadcast %cst_117 : f32 to vector<1x256xf32>
      %275 = arith.addf %274, %273 : vector<1x256xf32>
      %cst_118 = arith.constant 5.000000e-01 : f32
      %276 = vector.broadcast %cst_118 : f32 to vector<1x256xf32>
      %277 = arith.mulf %276, %275 : vector<1x256xf32>
      %278 = vector.shape_cast %277 : vector<1x256xf32> to vector<1x1x256xf32>
      %c0_119 = arith.constant 0 : index
      %c0_120 = arith.constant 0 : index
      %c0_121 = arith.constant 0 : index
      %279 = vector.load %arg4[%c0_119, %c0_120, %c0_121] : memref<1x1x256xf32, #tpu.memory_space<vmem>>, vector<1x1x256xf32>
      tpu.vector_store %arg4[%c0_119, %c0_120, %c0_121], %278 {strides = array<i32>} : memref<1x1x256xf32, #tpu.memory_space<vmem>>, vector<1x1x256xf32>,
    } else {
    }
    return
  }
  func.func @transform_0(%arg0: i32, %arg1: i32) -> (i32, i32, i32) {
    %c0_i32 = arith.constant 0 : i32
    %c0_i32_0 = arith.constant 0 : i32
    return %arg0, %arg1, %c0_i32 : i32, i32, i32
  }
  func.func @transform_1(%arg0: i32, %arg1: i32) -> (i32, i32, i32) {
    %c0_i32 = arith.constant 0 : i32
    %c0_i32_0 = arith.constant 0 : i32
    %c0_i32_1 = arith.constant 0 : i32
    %c0_i32_2 = arith.constant 0 : i32
    return %c0_i32, %c0_i32_0, %c0_i32_1 : i32, i32, i32
  }
  func.func @transform_2(%arg0: i32, %arg1: i32) -> (i32, i32, i32) {
    %c0_i32 = arith.constant 0 : i32
    %c0_i32_0 = arith.constant 0 : i32
    %c0_i32_1 = arith.constant 0 : i32
    return %arg0, %c0_i32, %c0_i32_0 : i32, i32, i32
  }
}

</mosaic_0001>

<llo_original>
// kernel: tpu_custom_call.1
$region0: #{tpu_custom_call.1}
  #allocation0 [shape = 'u32[]', space=smem, size = 0x4, offset = 0x4, fixed_abs, tag = 'smem constant byte address 0x4 - core index']
  #allocation1 [shape = 'u32[72,128]{1,0:T(1,128)}', space=vmem, size = 0x9000, scoped, tag = 'internal scratch']
  #allocation2 [shape = 'f32[1,256]{1,0:T(1,128)}', space=vmem, size = 0x400, scoped, tag = 'scratch operand']
  #allocation3 [shape = 'f32[1,256]{1,0:T(1,128)}', space=vmem, size = 0x400, scoped, tag = 'scratch operand']
  %s0 = inlined_call_operand.hbm [shape: f32[2,32,256], index: 0, kind: input, shape index: {}]
  %s1 = inlined_call_operand.hbm [shape: f32[49,2,256], index: 1, kind: input, shape index: {}]
  %s2 = inlined_call_operand.hbm [shape: f32[2,1,256], index: 2, kind: output, shape index: {}]
  %s3 = sld [smem:[#allocation0]]
  $region61: #{tpu_custom_call.1} parent=0
    _
  %s5 = ssub.s32 1, %s3
  %s6 = scalar_select 0, %s5, %s3
  $region1: #{tpu_custom_call.1} parent=0
    #allocation4 [shape = 'u8[65536]{0}', space=vmem, size = 0x10000, scoped, tag = 'input window, operand 0']
    #allocation5 [shape = 's32[2]{0}', space=sflag, size = 0x8, scoped, tag = 'scoped memory for tpu_custom_call.1']
    #allocation6 [shape = 's32[2]{0}', space=sflag, size = 0x8, scoped, tag = 'scoped memory for tpu_custom_call.1']
    #allocation7 [shape = 'u8[100352]{0}', space=vmem, size = 0x18800, scoped, tag = 'input window, operand 1, single buffered']
    #allocation8 [shape = 's32[1]{0}', space=sflag, size = 0x4, scoped, tag = 'scoped memory for tpu_custom_call.1']
    #allocation9 [shape = 'u8[2048]{0}', space=vmem, size = 0x800, scoped, tag = 'output window, operand 0']
    %7 = vsyncpa [#allocation5], 0
    %s8 = scalar_lea.sflag [#allocation5], 1
    %9 = vsyncpa %s8, 0
    %10 = vsyncpa [#allocation8], 0
    %11 = vsyncpa [#allocation6], 0
    %s12 = scalar_lea.sflag [#allocation6], 1
    %13 = vsyncpa %s12, 0
    loop: start=0, step=1, limit=4
    $region2: #{tpu_custom_call.1} parent=1 // loop_pre_header
      _
    $region3: #{tpu_custom_call.1} parent=1 // loop_header
      %s15 = sphi 0, %s19
      %p16 = scmp.ge.s32.totalorder %s15, 4
      %s22 = sphi 0, %s34
      %s23 = sphi 0, %s30
      %s24 = sphi 0, %s22
      %s25 = sphi 0, %s23
      %s26 = sphi 0, %s24
      %s27 = sphi 0, %s25
      %s39 = sphi 0, %s41
      %s42 = sphi 0, %s39
      %s43 = sphi 0, %s42
      %s59 = sphi 0, %s43
      %s63 = sphi 0, %s63
      %s65 = sphi 0, %s63
      %s66 = sphi 0, %s65
      %s80 = sphi 0, %s66
      %s86 = sphi 0, %s88
      %s89 = sphi 0, %s86
      %s90 = sphi 0, %s89
      %s106 = sphi 0, %s90
    $region4: #{tpu_custom_call.1} parent=1 // loop_header_branch
      %18 = sbr.rel (%p16) target = $region8
    $region5: #{tpu_custom_call.1} parent=1 // loop_body
      %s20 = ssub.s32 %s15, 1
      %s21 = ssub.s32 %s15, 2
      %s28 = sadd.s32 1, %s23
      %p29 = scmp.ge.s32.totalorder %s28, 1
      %s30 = scalar_select %p29, 0, %s28
      %s31 = sadd.s32 1, %s22
      %s32 = scalar_select %p29, %s31, %s22
      %p33 = scmp.ge.s32.totalorder %s32, 2
      %s34 = scalar_select %p33, 0, %s32
      %s35 = ssub.s32 %s22, %s34
      %s36 = ssub.s32 %s23, %s30
      %s37 = sor.u32 %s35, %s36
      %p38 = scmp.eq.s32.totalorder %s37, 0
      %s40 = sadd.s32 %s39, 1
      %s41 = scalar_select %p38, %s39, %s40
      %p44 = pneg %p38
      %p45 = scmp.eq.s32.totalorder %s15, 1
      %p46 = por %p44, %p45
      %p47 = scmp.ne.s32.totalorder %s39, %s42
      %p48 = scmp.eq.s32.totalorder %s15, 0
      %p49 = por %p47, %p48
      %p50 = scmp.ne.s32.totalorder %s39, %s42
      %p51 = scmp.eq.s32.totalorder %s20, 1
      %p52 = por %p50, %p51
      %p53 = scmp.ne.s32.totalorder %s42, %s43
      %p54 = scmp.eq.s32.totalorder %s20, 0
      %p55 = por %p53, %p54
      %p56 = scmp.ne.s32.totalorder %s42, %s43
      %p57 = scmp.eq.s32.totalorder %s21, 1
      %p58 = por %p56, %p57
      %p60 = scmp.ne.s32.totalorder %s43, %s59
      %p61 = scmp.eq.s32.totalorder %s21, 0
      %p62 = por %p60, %p61
      %s64 = sadd.s32 %s63, 1
      %p67 = scmp.eq.s32.totalorder %s15, 1
      %p68 = scmp.ne.s32.totalorder %s63, %s65
      %p69 = scmp.eq.s32.totalorder %s15, 0
      %p70 = por %p68, %p69
      %p71 = scmp.ne.s32.totalorder %s63, %s65
      %p72 = scmp.eq.s32.totalorder %s20, 1
      %p73 = por %p71, %p72
      %p74 = scmp.ne.s32.totalorder %s65, %s66
      %p75 = scmp.eq.s32.totalorder %s20, 0
      %p76 = por %p74, %p75
      %p77 = scmp.ne.s32.totalorder %s65, %s66
      %p78 = scmp.eq.s32.totalorder %s21, 1
      %p79 = por %p77, %p78
      %p81 = scmp.ne.s32.totalorder %s66, %s80
      %p82 = scmp.eq.s32.totalorder %s21, 0
      %p83 = por %p81, %p82
      %s84 = ssub.s32 %s22, %s34
      %p85 = scmp.eq.s32.totalorder %s84, 0
      %s87 = sadd.s32 %s86, 1
      %s88 = scalar_select %p85, %s86, %s87
      %p91 = pneg %p85
      %p92 = scmp.eq.s32.totalorder %s15, 1
      %p93 = por %p91, %p92
      %p94 = scmp.ne.s32.totalorder %s86, %s89
      %p95 = scmp.eq.s32.totalorder %s15, 0
      %p96 = por %p94, %p95
      %p97 = scmp.ne.s32.totalorder %s86, %s89
      %p98 = scmp.eq.s32.totalorder %s20, 1
      %p99 = por %p97, %p98
      %p100 = scmp.ne.s32.totalorder %s89, %s90
      %p101 = scmp.eq.s32.totalorder %s20, 0
      %p102 = por %p100, %p101
      %p103 = scmp.ne.s32.totalorder %s89, %s90
      %p104 = scmp.eq.s32.totalorder %s21, 1
      %p105 = por %p103, %p104
      %p107 = scmp.ne.s32.totalorder %s90, %s106
      %p108 = scmp.eq.s32.totalorder %s21, 0
      %p109 = por %p107, %p108
      %p110 = scmp.le.s32.totalorder 1, %s15
      %p111 = scmp.lt.s32.totalorder %s15, 3
      %p112 = pnand %p110, %p111
      %p113 = pneg %p112
      // Predicated region
      $region9: #{tpu_custom_call.1} parent=5 // pred_check
        _
      $region10: #{tpu_custom_call.1} parent=5 // pred_check_branch
        %115 = sbr.rel (%p112) target = $region12
      $region11: #{tpu_custom_call.1} parent=5 // pred_region
        %s116 = ssub.s32 %s15, 1
        // Predicated region
        $region13: #{tpu_custom_call.1} parent=11 // pred_check
          %p117 = pneg %p76
        $region14: #{tpu_custom_call.1} parent=11 // pred_check_branch
          %119 = sbr.rel (%p117) target = $region16
        $region15: #{tpu_custom_call.1} parent=11 // pred_region
          %121 = vsyncadd [#allocation8], 0
          %s122 = sshll.u32 %s1, 4
          %s123 = int_to_ptr.hbm [resolvable:$true] %s122
          %s124 = sshll.u32 [#allocation7], 4
          %s125 = int_to_ptr.vmem [resolvable:$true] %s124
          %130 = dma.hbm_to_vmem [thread:$0]  %s123, 3136, %s125, [#allocation8], 64, 64, 4
        $region16: #{tpu_custom_call.1} parent=11 // pred_fallthru
          _
      $region12: #{tpu_custom_call.1} parent=5 // pred_fallthru
        _
      %p131 = scmp.lt.s32.totalorder %s15, 2
      // Predicated region
      $region17: #{tpu_custom_call.1} parent=5 // pred_check
        %p132 = pneg %p131
      $region18: #{tpu_custom_call.1} parent=5 // pred_check_branch
        %134 = sbr.rel (%p132) target = $region20
      $region19: #{tpu_custom_call.1} parent=5 // pred_region
        // Predicated region
        $region21: #{tpu_custom_call.1} parent=19 // pred_check
          %p135 = pneg %p49
        $region22: #{tpu_custom_call.1} parent=19 // pred_check_branch
          %137 = sbr.rel (%p135) target = $region24
        $region23: #{tpu_custom_call.1} parent=19 // pred_region
          %s138 = sand.u32 %s39, 1
          %s139 = scalar_lea.sflag [#allocation5], %s138
          %s140 = sand.u32 %s39, 1
          %s141 = smul.addr %s140, 64
          %s142 = scalar_lea.vmem [#allocation4], %s141
          %s143 = smul.u32 4, %s23
          %145 = vsyncadd %s139, 0
          %s146 = smul.addr %s143, 2
          %s147 = smul.addr %s22, 8
          %s148 = sadd.s32 %s146, %s147
          %s149 = smul.addr %s148, 8
          %s150 = scalar_lea.hbm %s0, %s149
          %s151 = sshll.u32 %s150, 4
          %s152 = int_to_ptr.hbm [resolvable:$true] %s151
          %s153 = sshll.u32 %s142, 4
          %s154 = int_to_ptr.vmem [resolvable:$true] %s153
          %159 = dma.hbm_to_vmem [thread:$0]  %s152, 1024, %s154, %s139, 256, 256, 16
        $region24: #{tpu_custom_call.1} parent=19 // pred_fallthru
          _
      $region20: #{tpu_custom_call.1} parent=5 // pred_fallthru
        _
      %p160 = scmp.le.s32.totalorder 1, %s15
      %p161 = scmp.lt.s32.totalorder %s15, 3
      %p162 = pnand %p160, %p161
      %p163 = pneg %p162
      // Predicated region
      $region25: #{tpu_custom_call.1} parent=5 // pred_check
        _
      $region26: #{tpu_custom_call.1} parent=5 // pred_check_branch
        %165 = sbr.rel (%p162) target = $region28
      $region27: #{tpu_custom_call.1} parent=5 // pred_region
        %s166 = ssub.s32 %s15, 1
        %s167 = sand.u32 %s42, 1
        %s168 = scalar_lea.sflag [#allocation5], %s167
        %s169 = sand.u32 %s42, 1
        %s170 = smul.addr %s169, 64
        %s171 = scalar_lea.vmem [#allocation4], %s170
        // Predicated region
        $region29: #{tpu_custom_call.1} parent=27 // pred_check
          %p172 = pneg %p55
        $region30: #{tpu_custom_call.1} parent=27 // pred_check_branch
          %174 = sbr.rel (%p172) target = $region32
        $region31: #{tpu_custom_call.1} parent=27 // pred_region
          %176 = dma.done %s168, 1024
        $region32: #{tpu_custom_call.1} parent=27 // pred_fallthru
          _
        // Predicated region
        $region33: #{tpu_custom_call.1} parent=27 // pred_check
          %p177 = pneg %p76
        $region34: #{tpu_custom_call.1} parent=27 // pred_check_branch
          %179 = sbr.rel (%p177) target = $region36
        $region35: #{tpu_custom_call.1} parent=27 // pred_region
          %181 = dma.done [#allocation8], 3136
        $region36: #{tpu_custom_call.1} parent=27 // pred_fallthru
          _
        %s182 = sand.u32 %s42, 1
        %s183 = scalar_lea.sflag [#allocation5], %s182
        %s184 = sand.u32 %s42, 1
        %s185 = smul.addr %s184, 64
        %s186 = scalar_lea.vmem [#allocation4], %s185
        %p187 = pneg %p55
        %p188 = pneg %p52
        %p189 = pneg %p76
        %p190 = pneg %p73
        %p191 = pneg %p102
        %p192 = pneg %p99
        %s193 = sand.u32 %s89, 1
        %s194 = scalar_lea.sflag [#allocation6], %s193
        %s195 = sand.u32 %s89, 1
        %s196 = smul.addr %s195, 2
        %s197 = scalar_lea.vmem [#allocation9], %s196
        %s198 = smul.u32 4, %s25
        %v199 = vld [vmem:[%s171] sm:$0xff]
        %v200 = vld [vmem:[%s171 + $0x8] sm:$0xff]
        %v201 = vld [vmem:[%s171 + $0x10] sm:$0xff]
        %v202 = vld [vmem:[%s171 + $0x18] sm:$0xff]
        %v203 = vld [vmem:[%s171 + $0x20] sm:$0xff]
        %v204 = vld [vmem:[%s171 + $0x28] sm:$0xff]
        %v205 = vld [vmem:[%s171 + $0x30] sm:$0xff]
        %v206 = vld [vmem:[%s171 + $0x38] sm:$0xff]
        %v207 = vadd.f32 %v199, %v201
        %v208 = vadd.f32 %v207, %v203
        %v209 = vadd.f32 %v208, %v205
        %v210 = vrot.slane %v209, 4
        %v211 = vadd.f32 %v209, %v210
        %v212 = vrot.slane %v211, 2
        %v213 = vadd.f32 %v211, %v212
        %v214 = vrot.slane %v213, 1
        %v215 = vadd.f32 %v213, %v214
        %v216 = vadd.f32 %v200, %v202
        %v217 = vadd.f32 %v216, %v204
        %v218 = vadd.f32 %v217, %v206
        %v219 = vrot.slane %v218, 4
        %v220 = vadd.f32 %v218, %v219
        %v221 = vrot.slane %v220, 2
        %v222 = vadd.f32 %v220, %v221
        %v223 = vrot.slane %v222, 1
        %v224 = vadd.f32 %v222, %v223
        %v225 = vmax.f32 %v199, %v203
        %v226 = vmax.f32 %v201, %v205
        %v227 = vmax.f32 %v225, %v226
        %v228 = vrot.slane %v227, 4
        %v229 = vmax.f32 %v227, %v228
        %v230 = vrot.slane %v229, 2
        %v231 = vmax.f32 %v229, %v230
        %v232 = vrot.slane %v231, 1
        %v233 = vmax.f32 %v231, %v232
        %v234 = vmax.f32 %v200, %v204
        %v235 = vmax.f32 %v202, %v206
        %v236 = vmax.f32 %v234, %v235
        %v237 = vrot.slane %v236, 4
        %v238 = vmax.f32 %v236, %v237
        %v239 = vrot.slane %v238, 2
        %v240 = vmax.f32 %v238, %v239
        %v241 = vrot.slane %v240, 1
        %v242 = vmax.f32 %v240, %v241
        %p243 = scmp.eq.s32.totalorder %s25, 0
        // Predicated region
        $region37: #{tpu_custom_call.1} parent=27 // pred_check
          %p244 = pneg %p243
        $region38: #{tpu_custom_call.1} parent=27 // pred_check_branch
          %246 = sbr.rel (%p244) target = $region40
        $region39: #{tpu_custom_call.1} parent=27 // pred_region
          %v249 = vrot.slane %v224, 7
          %vm250 = vcmask 1040384
          %v251 = vsel %vm250, %v215, %v249
          %v253 = vlaneseq
          %vm254 = vcmp.ge.s32.totalorder %v253, 0
          %vm255 = vcmp.lt.s32.totalorder %v253, 256
          %vm256 = vmand %vm254, %vm255
          %257 = vst.msk [vmem:[#allocation2] sm:$0x3] %vm256, %v251
          %v260 = vrot.slane %v242, 7
          %v261 = vsel %vm250, %v233, %v260
          %263 = vst.msk [vmem:[#allocation3] sm:$0x3] %vm256, %v261
        $region40: #{tpu_custom_call.1} parent=27 // pred_fallthru
          _
        %p264 = scmp.gt.s32.totalorder %s25, 0
        // Predicated region
        $region41: #{tpu_custom_call.1} parent=27 // pred_check
          %p265 = pneg %p264
        $region42: #{tpu_custom_call.1} parent=27 // pred_check_branch
          %267 = sbr.rel (%p265) target = $region44
        $region43: #{tpu_custom_call.1} parent=27 // pred_region
          %v268 = vld [vmem:[#allocation2] sm:$0x3]
          %v271 = vrot.slane %v224, 7
          %vm272 = vcmask 1040384
          %v273 = vsel %vm272, %v215, %v271
          %v275 = vadd.f32 %v268, %v273
          %v276 = vlaneseq
          %vm277 = vcmp.ge.s32.totalorder %v276, 0
          %vm278 = vcmp.lt.s32.totalorder %v276, 256
          %vm279 = vmand %vm277, %vm278
          %280 = vst.msk [vmem:[#allocation2] sm:$0x3] %vm279, %v275
          %v281 = vld [vmem:[#allocation3] sm:$0x3]
          %v284 = vrot.slane %v242, 7
          %v285 = vsel %vm272, %v233, %v284
          %v287 = vmax.f32 %v281, %v285
          %288 = vst.msk [vmem:[#allocation3] sm:$0x3] %vm279, %v287
        $region44: #{tpu_custom_call.1} parent=27 // pred_fallthru
          _
        // Predicated region
        $region45: #{tpu_custom_call.1} parent=27 // pred_check
          %p289 = pneg %p243
        $region46: #{tpu_custom_call.1} parent=27 // pred_check_branch
          %291 = sbr.rel (%p289) target = $region48
        $region47: #{tpu_custom_call.1} parent=27 // pred_region
          %v292 = vld [vmem:[#allocation2] sm:$0x3]
          %v293 = vmul.f32 %v292, 0.03125
          %v294 = vld [vmem:[#allocation3] sm:$0x3]
          %v296 = vperm.slane %v293, 0
          %v297 = vperm.slane %v293, 1
          %v301 = vperm.slane %v294, 0
          %v302 = vperm.slane %v294, 1
          %vm305 = vcmask 1040384
          %v306 = vsel %vm305, %v296, %v301
          %v307 = vsel %vm305, %v297, %v302
          %308 = vrot.lane.b32.xlu0 %v306, 51
          %v309 = vpop.permute.xlu0 %308
          %310 = vrot.lane.b32.xlu0 %v307, 51
          %v311 = vpop.permute.xlu0 %310
          %v312 = vlaneseq
          %v313 = vand.u32 %v312, 127
          %vm314 = vcmp.lt.s32.totalorder %v313, 51
          %v315 = vsel %vm314, %v309, %v311
          %v316 = vsel %vm314, %v311, %v309
          %v317 = vld [vmem:[#allocation7] sm:$0xf]
          %v320 = vrot.slane %v315, 6
          %vm321 = vcmask 1041408
          %v322 = vsel %vm321, %v316, %v320
          %v324 = vmul.f32 %v317, %v322
          %v325 = vadd.f32 %v324, 0.0
          %326 = vrot.lane.b32.xlu0 %v306, 50
          %v327 = vpop.permute.xlu0 %326
          %328 = vrot.lane.b32.xlu0 %v307, 50
          %v329 = vpop.permute.xlu0 %328
          %vm330 = vcmp.lt.s32.totalorder %v313, 50
          %v331 = vsel %vm330, %v327, %v329
          %v332 = vsel %vm330, %v329, %v327
          %s333 = scalar_lea.vmem [#allocation7], 4
          %v334 = vld [vmem:[%s333] sm:$0xf]
          %v337 = vrot.slane %v331, 6
          %v338 = vsel %vm321, %v332, %v337
          %v340 = vmul.f32 %v334, %v338
          %v341 = vadd.f32 %v340, 0.0
          %342 = vrot.lane.b32.xlu0 %v306, 49
          %v343 = vpop.permute.xlu0 %342
          %344 = vrot.lane.b32.xlu0 %v307, 49
          %v345 = vpop.permute.xlu0 %344
          %vm346 = vcmp.lt.s32.totalorder %v313, 49
          %v347 = vsel %vm346, %v343, %v345
          %v348 = vsel %vm346, %v345, %v343
          %s349 = scalar_lea.vmem [#allocation7], 8
          %v350 = vld [vmem:[%s349] sm:$0xf]
          %v353 = vrot.slane %v347, 6
          %v354 = vsel %vm321, %v348, %v353
          %v356 = vmul.f32 %v350, %v354
          %v357 = vadd.f32 %v356, 0.0
          %358 = vrot.lane.b32.xlu0 %v306, 48
          %v359 = vpop.permute.xlu0 %358
          %360 = vrot.lane.b32.xlu0 %v307, 48
          %v361 = vpop.permute.xlu0 %360
          %vm362 = vcmp.lt.s32.totalorder %v313, 48
          %v363 = vsel %vm362, %v359, %v361
          %v364 = vsel %vm362, %v361, %v359
          %s365 = scalar_lea.vmem [#allocation7], 12
          %v366 = vld [vmem:[%s365] sm:$0xf]
          %v369 = vrot.slane %v363, 6
          %v370 = vsel %vm321, %v364, %v369
          %v372 = vmul.f32 %v366, %v370
          %v373 = vadd.f32 %v372, 0.0
          %374 = vrot.lane.b32.xlu0 %v306, 47
          %v375 = vpop.permute.xlu0 %374
          %376 = vrot.lane.b32.xlu0 %v307, 47
          %v377 = vpop.permute.xlu0 %376
          %vm378 = vcmp.lt.s32.totalorder %v313, 47
          %v379 = vsel %vm378, %v375, %v377
          %v380 = vsel %vm378, %v377, %v375
          %s381 = scalar_lea.vmem [#allocation7], 16
          %v382 = vld [vmem:[%s381] sm:$0xf]
          %v385 = vrot.slane %v379, 6
          %v386 = vsel %vm321, %v380, %v385
          %v388 = vmul.f32 %v382, %v386
          %v389 = vadd.f32 %v325, %v388
          %390 = vrot.lane.b32.xlu0 %v306, 46
          %v391 = vpop.permute.xlu0 %390
          %392 = vrot.lane.b32.xlu0 %v307, 46
          %v393 = vpop.permute.xlu0 %392
          %vm394 = vcmp.lt.s32.totalorder %v313, 46
          %v395 = vsel %vm394, %v391, %v393
          %v396 = vsel %vm394, %v393, %v391
          %s397 = scalar_lea.vmem [#allocation7], 20
          %v398 = vld [vmem:[%s397] sm:$0xf]
          %v401 = vrot.slane %v395, 6
          %v402 = vsel %vm321, %v396, %v401
          %v404 = vmul.f32 %v398, %v402
          %v405 = vadd.f32 %v341, %v404
          %406 = vrot.lane.b32.xlu0 %v306, 45
          %v407 = vpop.permute.xlu0 %406
          %408 = vrot.lane.b32.xlu0 %v307, 45
          %v409 = vpop.permute.xlu0 %408
          %vm410 = vcmp.lt.s32.totalorder %v313, 45
          %v411 = vsel %vm410, %v407, %v409
          %v412 = vsel %vm410, %v409, %v407
          %s413 = scalar_lea.vmem [#allocation7], 24
          %v414 = vld [vmem:[%s413] sm:$0xf]
          %v417 = vrot.slane %v411, 6
          %v418 = vsel %vm321, %v412, %v417
          %v420 = vmul.f32 %v414, %v418
          %v421 = vadd.f32 %v357, %v420
          %422 = vrot.lane.b32.xlu0 %v306, 35
          %v423 = vpop.permute.xlu0 %422
          %424 = vrot.lane.b32.xlu0 %v307, 35
          %v425 = vpop.permute.xlu0 %424
          %vm426 = vcmp.lt.s32.totalorder %v313, 35
          %v427 = vsel %vm426, %v423, %v425
          %v428 = vsel %vm426, %v425, %v423
          %s429 = scalar_lea.vmem [#allocation7], 28
          %v430 = vld [vmem:[%s429] sm:$0xf]
          %v433 = vrot.slane %v427, 6
          %v434 = vsel %vm321, %v428, %v433
          %v436 = vmul.f32 %v430, %v434
          %v437 = vadd.f32 %v373, %v436
          %438 = vrot.lane.b32.xlu0 %v306, 34
          %v439 = vpop.permute.xlu0 %438
          %440 = vrot.lane.b32.xlu0 %v307, 34
          %v441 = vpop.permute.xlu0 %440
          %vm442 = vcmp.lt.s32.totalorder %v313, 34
          %v443 = vsel %vm442, %v439, %v441
          %v444 = vsel %vm442, %v441, %v439
          %s445 = scalar_lea.vmem [#allocation7], 32
          %v446 = vld [vmem:[%s445] sm:$0xf]
          %v449 = vrot.slane %v443, 6
          %v450 = vsel %vm321, %v444, %v449
          %v452 = vmul.f32 %v446, %v450
          %v453 = vadd.f32 %v389, %v452
          %454 = vrot.lane.b32.xlu0 %v306, 33
          %v455 = vpop.permute.xlu0 %454
          %456 = vrot.lane.b32.xlu0 %v307, 33
          %v457 = vpop.permute.xlu0 %456
          %vm458 = vcmp.lt.s32.totalorder %v313, 33
          %v459 = vsel %vm458, %v455, %v457
          %v460 = vsel %vm458, %v457, %v455
          %s461 = scalar_lea.vmem [#allocation7], 36
          %v462 = vld [vmem:[%s461] sm:$0xf]
          %v465 = vrot.slane %v459, 6
          %v466 = vsel %vm321, %v460, %v465
          %v468 = vmul.f32 %v462, %v466
          %v469 = vadd.f32 %v405, %v468
          %470 = vrot.lane.b32.xlu0 %v306, 32
          %v471 = vpop.permute.xlu0 %470
          %472 = vrot.lane.b32.xlu0 %v307, 32
          %v473 = vpop.permute.xlu0 %472
          %vm474 = vcmp.lt.s32.totalorder %v313, 32
          %v475 = vsel %vm474, %v471, %v473
          %v476 = vsel %vm474, %v473, %v471
          %s477 = scalar_lea.vmem [#allocation7], 40
          %v478 = vld [vmem:[%s477] sm:$0xf]
          %v481 = vrot.slane %v475, 6
          %v482 = vsel %vm321, %v476, %v481
          %v484 = vmul.f32 %v478, %v482
          %v485 = vadd.f32 %v421, %v484
          %486 = vrot.lane.b32.xlu0 %v306, 31
          %v487 = vpop.permute.xlu0 %486
          %488 = vrot.lane.b32.xlu0 %v307, 31
          %v489 = vpop.permute.xlu0 %488
          %vm490 = vcmp.lt.s32.totalorder %v313, 31
          %v491 = vsel %vm490, %v487, %v489
          %v492 = vsel %vm490, %v489, %v487
          %s493 = scalar_lea.vmem [#allocation7], 44
          %v494 = vld [vmem:[%s493] sm:$0xf]
          %v497 = vrot.slane %v491, 6
          %v498 = vsel %vm321, %v492, %v497
          %v500 = vmul.f32 %v494, %v498
          %v501 = vadd.f32 %v437, %v500
          %502 = vrot.lane.b32.xlu0 %v306, 30
          %v503 = vpop.permute.xlu0 %502
          %504 = vrot.lane.b32.xlu0 %v307, 30
          %v505 = vpop.permute.xlu0 %504
          %vm506 = vcmp.lt.s32.totalorder %v313, 30
          %v507 = vsel %vm506, %v503, %v505
          %v508 = vsel %vm506, %v505, %v503
          %s509 = scalar_lea.vmem [#allocation7], 48
          %v510 = vld [vmem:[%s509] sm:$0xf]
          %v513 = vrot.slane %v507, 6
          %v514 = vsel %vm321, %v508, %v513
          %v516 = vmul.f32 %v510, %v514
          %v517 = vadd.f32 %v453, %v516
          %518 = vrot.lane.b32.xlu0 %v306, 29
          %v519 = vpop.permute.xlu0 %518
          %520 = vrot.lane.b32.xlu0 %v307, 29
          %v521 = vpop.permute.xlu0 %520
          %vm522 = vcmp.lt.s32.totalorder %v313, 29
          %v523 = vsel %vm522, %v519, %v521
          %v524 = vsel %vm522, %v521, %v519
          %s525 = scalar_lea.vmem [#allocation7], 52
          %v526 = vld [vmem:[%s525] sm:$0xf]
          %v529 = vrot.slane %v523, 6
          %v530 = vsel %vm321, %v524, %v529
          %v532 = vmul.f32 %v526, %v530
          %v533 = vadd.f32 %v469, %v532
          %534 = vrot.lane.b32.xlu0 %v306, 19
          %v535 = vpop.permute.xlu0 %534
          %536 = vrot.lane.b32.xlu0 %v307, 19
          %v537 = vpop.permute.xlu0 %536
          %vm538 = vcmp.lt.s32.totalorder %v313, 19
          %v539 = vsel %vm538, %v535, %v537
          %v540 = vsel %vm538, %v537, %v535
          %s541 = scalar_lea.vmem [#allocation7], 56
          %v542 = vld [vmem:[%s541] sm:$0xf]
          %v545 = vrot.slane %v539, 6
          %v546 = vsel %vm321, %v540, %v545
          %v548 = vmul.f32 %v542, %v546
          %v549 = vadd.f32 %v485, %v548
          %550 = vrot.lane.b32.xlu0 %v306, 18
          %v551 = vpop.permute.xlu0 %550
          %552 = vrot.lane.b32.xlu0 %v307, 18
          %v553 = vpop.permute.xlu0 %552
          %vm554 = vcmp.lt.s32.totalorder %v313, 18
          %v555 = vsel %vm554, %v551, %v553
          %v556 = vsel %vm554, %v553, %v551
          %s557 = scalar_lea.vmem [#allocation7], 60
          %v558 = vld [vmem:[%s557] sm:$0xf]
          %v561 = vrot.slane %v555, 6
          %v562 = vsel %vm321, %v556, %v561
          %v564 = vmul.f32 %v558, %v562
          %v565 = vadd.f32 %v501, %v564
          %566 = vrot.lane.b32.xlu0 %v306, 17
          %v567 = vpop.permute.xlu0 %566
          %568 = vrot.lane.b32.xlu0 %v307, 17
          %v569 = vpop.permute.xlu0 %568
          %vm570 = vcmp.lt.s32.totalorder %v313, 17
          %v571 = vsel %vm570, %v567, %v569
          %v572 = vsel %vm570, %v569, %v567
          %s573 = scalar_lea.vmem [#allocation7], 64
          %v574 = vld [vmem:[%s573] sm:$0xf]
          %v577 = vrot.slane %v571, 6
          %v578 = vsel %vm321, %v572, %v577
          %v580 = vmul.f32 %v574, %v578
          %v581 = vadd.f32 %v517, %v580
          %582 = vrot.lane.b32.xlu0 %v306, 16
          %v583 = vpop.permute.xlu0 %582
          %584 = vrot.lane.b32.xlu0 %v307, 16
          %v585 = vpop.permute.xlu0 %584
          %vm586 = vcmp.lt.s32.totalorder %v313, 16
          %v587 = vsel %vm586, %v583, %v585
          %v588 = vsel %vm586, %v585, %v583
          %s589 = scalar_lea.vmem [#allocation7], 68
          %v590 = vld [vmem:[%s589] sm:$0xf]
          %v593 = vrot.slane %v587, 6
          %v594 = vsel %vm321, %v588, %v593
          %v596 = vmul.f32 %v590, %v594
          %v597 = vadd.f32 %v533, %v596
          %598 = vrot.lane.b32.xlu0 %v306, 15
          %v599 = vpop.permute.xlu0 %598
          %600 = vrot.lane.b32.xlu0 %v307, 15
          %v601 = vpop.permute.xlu0 %600
          %vm602 = vcmp.lt.s32.totalorder %v313, 15
          %v603 = vsel %vm602, %v599, %v601
          %v604 = vsel %vm602, %v601, %v599
          %s605 = scalar_lea.vmem [#allocation7], 72
          %v606 = vld [vmem:[%s605] sm:$0xf]
          %v609 = vrot.slane %v603, 6
          %v610 = vsel %vm321, %v604, %v609
          %v612 = vmul.f32 %v606, %v610
          %v613 = vadd.f32 %v549, %v612
          %614 = vrot.lane.b32.xlu0 %v306, 14
          %v615 = vpop.permute.xlu0 %614
          %616 = vrot.lane.b32.xlu0 %v307, 14
          %v617 = vpop.permute.xlu0 %616
          %vm618 = vcmp.lt.s32.totalorder %v313, 14
          %v619 = vsel %vm618, %v615, %v617
          %v620 = vsel %vm618, %v617, %v615
          %s621 = scalar_lea.vmem [#allocation7], 76
          %v622 = vld [vmem:[%s621] sm:$0xf]
          %v625 = vrot.slane %v619, 6
          %v626 = vsel %vm321, %v620, %v625
          %v628 = vmul.f32 %v622, %v626
          %v629 = vadd.f32 %v565, %v628
          %630 = vrot.lane.b32.xlu0 %v306, 13
          %v631 = vpop.permute.xlu0 %630
          %632 = vrot.lane.b32.xlu0 %v307, 13
          %v633 = vpop.permute.xlu0 %632
          %vm634 = vcmp.lt.s32.totalorder %v313, 13
          %v635 = vsel %vm634, %v631, %v633
          %v636 = vsel %vm634, %v633, %v631
          %s637 = scalar_lea.vmem [#allocation7], 80
          %v638 = vld [vmem:[%s637] sm:$0xf]
          %v641 = vrot.slane %v635, 6
          %v642 = vsel %vm321, %v636, %v641
          %v644 = vmul.f32 %v638, %v642
          %v645 = vadd.f32 %v581, %v644
          %646 = vrot.lane.b32.xlu0 %v306, 3
          %v647 = vpop.permute.xlu0 %646
          %648 = vrot.lane.b32.xlu0 %v307, 3
          %v649 = vpop.permute.xlu0 %648
          %vm650 = vcmp.lt.s32.totalorder %v313, 3
          %v651 = vsel %vm650, %v647, %v649
          %v652 = vsel %vm650, %v649, %v647
          %s653 = scalar_lea.vmem [#allocation7], 84
          %v654 = vld [vmem:[%s653] sm:$0xf]
          %v657 = vrot.slane %v651, 6
          %v658 = vsel %vm321, %v652, %v657
          %v660 = vmul.f32 %v654, %v658
          %v661 = vadd.f32 %v597, %v660
          %662 = vrot.lane.b32.xlu0 %v306, 2
          %v663 = vpop.permute.xlu0 %662
          %664 = vrot.lane.b32.xlu0 %v307, 2
          %v665 = vpop.permute.xlu0 %664
          %vm666 = vcmp.lt.s32.totalorder %v313, 2
          %v667 = vsel %vm666, %v663, %v665
          %v668 = vsel %vm666, %v665, %v663
          %s669 = scalar_lea.vmem [#allocation7], 88
          %v670 = vld [vmem:[%s669] sm:$0xf]
          %v673 = vrot.slane %v667, 6
          %v674 = vsel %vm321, %v668, %v673
          %v676 = vmul.f32 %v670, %v674
          %v677 = vadd.f32 %v613, %v676
          %678 = vrot.lane.b32.xlu0 %v306, 1
          %v679 = vpop.permute.xlu0 %678
          %680 = vrot.lane.b32.xlu0 %v307, 1
          %v681 = vpop.permute.xlu0 %680
          %vm682 = vcmp.lt.s32.totalorder %v313, 1
          %v683 = vsel %vm682, %v679, %v681
          %v684 = vsel %vm682, %v681, %v679
          %s685 = scalar_lea.vmem [#allocation7], 92
          %v686 = vld [vmem:[%s685] sm:$0xf]
          %v689 = vrot.slane %v683, 6
          %v690 = vsel %vm321, %v684, %v689
          %v692 = vmul.f32 %v686, %v690
          %v693 = vadd.f32 %v629, %v692
          %s694 = scalar_lea.vmem [#allocation7], 96
          %v695 = vld [vmem:[%s694] sm:$0xf]
          %v698 = vrot.slane %v307, 6
          %v699 = vsel %vm321, %v306, %v698
          %v701 = vmul.f32 %v695, %v699
          %v702 = vadd.f32 %v645, %v701
          %703 = vrot.lane.b32.xlu0 %v306, 127
          %v704 = vpop.permute.xlu0 %703
          %705 = vrot.lane.b32.xlu0 %v307, 127
          %v706 = vpop.permute.xlu0 %705
          %vm707 = vcmp.lt.s32.totalorder %v313, 127
          %v708 = vsel %vm707, %v704, %v706
          %v709 = vsel %vm707, %v706, %v704
          %s710 = scalar_lea.vmem [#allocation7], 100
          %v711 = vld [vmem:[%s710] sm:$0xf]
          %v714 = vrot.slane %v709, 6
          %v715 = vsel %vm321, %v708, %v714
          %v717 = vmul.f32 %v711, %v715
          %v718 = vadd.f32 %v661, %v717
          %719 = vrot.lane.b32.xlu0 %v306, 126
          %v720 = vpop.permute.xlu0 %719
          %721 = vrot.lane.b32.xlu0 %v307, 126
          %v722 = vpop.permute.xlu0 %721
          %vm723 = vcmp.lt.s32.totalorder %v313, 126
          %v724 = vsel %vm723, %v720, %v722
          %v725 = vsel %vm723, %v722, %v720
          %s726 = scalar_lea.vmem [#allocation7], 104
          %v727 = vld [vmem:[%s726] sm:$0xf]
          %v730 = vrot.slane %v725, 6
          %v731 = vsel %vm321, %v724, %v730
          %v733 = vmul.f32 %v727, %v731
          %v734 = vadd.f32 %v677, %v733
          %735 = vrot.lane.b32.xlu0 %v306, 125
          %v736 = vpop.permute.xlu0 %735
          %737 = vrot.lane.b32.xlu0 %v307, 125
          %v738 = vpop.permute.xlu0 %737
          %vm739 = vcmp.lt.s32.totalorder %v313, 125
          %v740 = vsel %vm739, %v736, %v738
          %v741 = vsel %vm739, %v738, %v736
          %s742 = scalar_lea.vmem [#allocation7], 108
          %v743 = vld [vmem:[%s742] sm:$0xf]
          %v746 = vrot.slane %v741, 6
          %v747 = vsel %vm321, %v740, %v746
          %v749 = vmul.f32 %v743, %v747
          %v750 = vadd.f32 %v693, %v749
          %751 = vrot.lane.b32.xlu0 %v306, 115
          %v752 = vpop.permute.xlu0 %751
          %753 = vrot.lane.b32.xlu0 %v307, 115
          %v754 = vpop.permute.xlu0 %753
          %vm755 = vcmp.lt.s32.totalorder %v313, 115
          %v756 = vsel %vm755, %v752, %v754
          %v757 = vsel %vm755, %v754, %v752
          %s758 = scalar_lea.vmem [#allocation7], 112
          %v759 = vld [vmem:[%s758] sm:$0xf]
          %v762 = vrot.slane %v757, 6
          %v763 = vsel %vm321, %v756, %v762
          %v765 = vmul.f32 %v759, %v763
          %v766 = vadd.f32 %v702, %v765
          %767 = vrot.lane.b32.xlu0 %v306, 114
          %v768 = vpop.permute.xlu0 %767
          %769 = vrot.lane.b32.xlu0 %v307, 114
          %v770 = vpop.permute.xlu0 %769
          %vm771 = vcmp.lt.s32.totalorder %v313, 114
          %v772 = vsel %vm771, %v768, %v770
          %v773 = vsel %vm771, %v770, %v768
          %s774 = scalar_lea.vmem [#allocation7], 116
          %v775 = vld [vmem:[%s774] sm:$0xf]
          %v778 = vrot.slane %v773, 6
          %v779 = vsel %vm321, %v772, %v778
          %v781 = vmul.f32 %v775, %v779
          %v782 = vadd.f32 %v718, %v781
          %783 = vrot.lane.b32.xlu0 %v306, 113
          %v784 = vpop.permute.xlu0 %783
          %785 = vrot.lane.b32.xlu0 %v307, 113
          %v786 = vpop.permute.xlu0 %785
          %vm787 = vcmp.lt.s32.totalorder %v313, 113
          %v788 = vsel %vm787, %v784, %v786
          %v789 = vsel %vm787, %v786, %v784
          %s790 = scalar_lea.vmem [#allocation7], 120
          %v791 = vld [vmem:[%s790] sm:$0xf]
          %v794 = vrot.slane %v789, 6
          %v795 = vsel %vm321, %v788, %v794
          %v797 = vmul.f32 %v791, %v795
          %v798 = vadd.f32 %v734, %v797
          %799 = vrot.lane.b32.xlu0 %v306, 112
          %v800 = vpop.permute.xlu0 %799
          %801 = vrot.lane.b32.xlu0 %v307, 112
          %v802 = vpop.permute.xlu0 %801
          %vm803 = vcmp.lt.s32.totalorder %v313, 112
          %v804 = vsel %vm803, %v800, %v802
          %v805 = vsel %vm803, %v802, %v800
          %s806 = scalar_lea.vmem [#allocation7], 124
          %v807 = vld [vmem:[%s806] sm:$0xf]
          %v810 = vrot.slane %v805, 6
          %v811 = vsel %vm321, %v804, %v810
          %v813 = vmul.f32 %v807, %v811
          %v814 = vadd.f32 %v750, %v813
          %815 = vrot.lane.b32.xlu0 %v306, 111
          %v816 = vpop.permute.xlu0 %815
          %817 = vrot.lane.b32.xlu0 %v307, 111
          %v818 = vpop.permute.xlu0 %817
          %vm819 = vcmp.lt.s32.totalorder %v313, 111
          %v820 = vsel %vm819, %v816, %v818
          %v821 = vsel %vm819, %v818, %v816
          %s822 = scalar_lea.vmem [#allocation7], 128
          %v823 = vld [vmem:[%s822] sm:$0xf]
          %v826 = vrot.slane %v821, 6
          %v827 = vsel %vm321, %v820, %v826
          %v829 = vmul.f32 %v823, %v827
          %v830 = vadd.f32 %v766, %v829
          %831 = vrot.lane.b32.xlu0 %v306, 110
          %v832 = vpop.permute.xlu0 %831
          %833 = vrot.lane.b32.xlu0 %v307, 110
          %v834 = vpop.permute.xlu0 %833
          %vm835 = vcmp.lt.s32.totalorder %v313, 110
          %v836 = vsel %vm835, %v832, %v834
          %v837 = vsel %vm835, %v834, %v832
          %s838 = scalar_lea.vmem [#allocation7], 132
          %v839 = vld [vmem:[%s838] sm:$0xf]
          %v842 = vrot.slane %v837, 6
          %v843 = vsel %vm321, %v836, %v842
          %v845 = vmul.f32 %v839, %v843
          %v846 = vadd.f32 %v782, %v845
          %847 = vrot.lane.b32.xlu0 %v306, 109
          %v848 = vpop.permute.xlu0 %847
          %849 = vrot.lane.b32.xlu0 %v307, 109
          %v850 = vpop.permute.xlu0 %849
          %vm851 = vcmp.lt.s32.totalorder %v313, 109
          %v852 = vsel %vm851, %v848, %v850
          %v853 = vsel %vm851, %v850, %v848
          %s854 = scalar_lea.vmem [#allocation7], 136
          %v855 = vld [vmem:[%s854] sm:$0xf]
          %v858 = vrot.slane %v853, 6
          %v859 = vsel %vm321, %v852, %v858
          %v861 = vmul.f32 %v855, %v859
          %v862 = vadd.f32 %v798, %v861
          %863 = vrot.lane.b32.xlu0 %v306, 99
          %v864 = vpop.permute.xlu0 %863
          %865 = vrot.lane.b32.xlu0 %v307, 99
          %v866 = vpop.permute.xlu0 %865
          %vm867 = vcmp.lt.s32.totalorder %v313, 99
          %v868 = vsel %vm867, %v864, %v866
          %v869 = vsel %vm867, %v866, %v864
          %s870 = scalar_lea.vmem [#allocation7], 140
          %v871 = vld [vmem:[%s870] sm:$0xf]
          %v874 = vrot.slane %v869, 6
          %v875 = vsel %vm321, %v868, %v874
          %v877 = vmul.f32 %v871, %v875
          %v878 = vadd.f32 %v814, %v877
          %879 = vrot.lane.b32.xlu0 %v306, 98
          %v880 = vpop.permute.xlu0 %879
          %881 = vrot.lane.b32.xlu0 %v307, 98
          %v882 = vpop.permute.xlu0 %881
          %vm883 = vcmp.lt.s32.totalorder %v313, 98
          %v884 = vsel %vm883, %v880, %v882
          %v885 = vsel %vm883, %v882, %v880
          %s886 = scalar_lea.vmem [#allocation7], 144
          %v887 = vld [vmem:[%s886] sm:$0xf]
          %v890 = vrot.slane %v885, 6
          %v891 = vsel %vm321, %v884, %v890
          %v893 = vmul.f32 %v887, %v891
          %v894 = vadd.f32 %v830, %v893
          %895 = vrot.lane.b32.xlu0 %v306, 97
          %v896 = vpop.permute.xlu0 %895
          %897 = vrot.lane.b32.xlu0 %v307, 97
          %v898 = vpop.permute.xlu0 %897
          %vm899 = vcmp.lt.s32.totalorder %v313, 97
          %v900 = vsel %vm899, %v896, %v898
          %v901 = vsel %vm899, %v898, %v896
          %s902 = scalar_lea.vmem [#allocation7], 148
          %v903 = vld [vmem:[%s902] sm:$0xf]
          %v906 = vrot.slane %v901, 6
          %v907 = vsel %vm321, %v900, %v906
          %v909 = vmul.f32 %v903, %v907
          %v910 = vadd.f32 %v846, %v909
          %911 = vrot.lane.b32.xlu0 %v306, 96
          %v912 = vpop.permute.xlu0 %911
          %913 = vrot.lane.b32.xlu0 %v307, 96
          %v914 = vpop.permute.xlu0 %913
          %vm915 = vcmp.lt.s32.totalorder %v313, 96
          %v916 = vsel %vm915, %v912, %v914
          %v917 = vsel %vm915, %v914, %v912
          %s918 = scalar_lea.vmem [#allocation7], 152
          %v919 = vld [vmem:[%s918] sm:$0xf]
          %v922 = vrot.slane %v917, 6
          %v923 = vsel %vm321, %v916, %v922
          %v925 = vmul.f32 %v919, %v923
          %v926 = vadd.f32 %v862, %v925
          %927 = vrot.lane.b32.xlu0 %v306, 95
          %v928 = vpop.permute.xlu0 %927
          %929 = vrot.lane.b32.xlu0 %v307, 95
          %v930 = vpop.permute.xlu0 %929
          %vm931 = vcmp.lt.s32.totalorder %v313, 95
          %v932 = vsel %vm931, %v928, %v930
          %v933 = vsel %vm931, %v930, %v928
          %s934 = scalar_lea.vmem [#allocation7], 156
          %v935 = vld [vmem:[%s934] sm:$0xf]
          %v938 = vrot.slane %v933, 6
          %v939 = vsel %vm321, %v932, %v938
          %v941 = vmul.f32 %v935, %v939
          %v942 = vadd.f32 %v878, %v941
          %943 = vrot.lane.b32.xlu0 %v306, 94
          %v944 = vpop.permute.xlu0 %943
          %945 = vrot.lane.b32.xlu0 %v307, 94
          %v946 = vpop.permute.xlu0 %945
          %vm947 = vcmp.lt.s32.totalorder %v313, 94
          %v948 = vsel %vm947, %v944, %v946
          %v949 = vsel %vm947, %v946, %v944
          %s950 = scalar_lea.vmem [#allocation7], 160
          %v951 = vld [vmem:[%s950] sm:$0xf]
          %v954 = vrot.slane %v949, 6
          %v955 = vsel %vm321, %v948, %v954
          %v957 = vmul.f32 %v951, %v955
          %v958 = vadd.f32 %v894, %v957
          %959 = vrot.lane.b32.xlu0 %v306, 93
          %v960 = vpop.permute.xlu0 %959
          %961 = vrot.lane.b32.xlu0 %v307, 93
          %v962 = vpop.permute.xlu0 %961
          %vm963 = vcmp.lt.s32.totalorder %v313, 93
          %v964 = vsel %vm963, %v960, %v962
          %v965 = vsel %vm963, %v962, %v960
          %s966 = scalar_lea.vmem [#allocation7], 164
          %v967 = vld [vmem:[%s966] sm:$0xf]
          %v970 = vrot.slane %v965, 6
          %v971 = vsel %vm321, %v964, %v970
          %v973 = vmul.f32 %v967, %v971
          %v974 = vadd.f32 %v910, %v973
          %975 = vrot.lane.b32.xlu0 %v306, 83
          %v976 = vpop.permute.xlu0 %975
          %977 = vrot.lane.b32.xlu0 %v307, 83
          %v978 = vpop.permute.xlu0 %977
          %vm979 = vcmp.lt.s32.totalorder %v313, 83
          %v980 = vsel %vm979, %v976, %v978
          %v981 = vsel %vm979, %v978, %v976
          %s982 = scalar_lea.vmem [#allocation7], 168
          %v983 = vld [vmem:[%s982] sm:$0xf]
          %v986 = vrot.slane %v981, 6
          %v987 = vsel %vm321, %v980, %v986
          %v989 = vmul.f32 %v983, %v987
          %v990 = vadd.f32 %v926, %v989
          %991 = vrot.lane.b32.xlu0 %v306, 82
          %v992 = vpop.permute.xlu0 %991
          %993 = vrot.lane.b32.xlu0 %v307, 82
          %v994 = vpop.permute.xlu0 %993
          %vm995 = vcmp.lt.s32.totalorder %v313, 82
          %v996 = vsel %vm995, %v992, %v994
          %v997 = vsel %vm995, %v994, %v992
          %s998 = scalar_lea.vmem [#allocation7], 172
          %v999 = vld [vmem:[%s998] sm:$0xf]
          %v1002 = vrot.slane %v997, 6
          %v1003 = vsel %vm321, %v996, %v1002
          %v1005 = vmul.f32 %v999, %v1003
          %v1006 = vadd.f32 %v942, %v1005
          %1007 = vrot.lane.b32.xlu0 %v306, 81
          %v1008 = vpop.permute.xlu0 %1007
          %1009 = vrot.lane.b32.xlu0 %v307, 81
          %v1010 = vpop.permute.xlu0 %1009
          %vm1011 = vcmp.lt.s32.totalorder %v313, 81
          %v1012 = vsel %vm1011, %v1008, %v1010
          %v1013 = vsel %vm1011, %v1010, %v1008
          %s1014 = scalar_lea.vmem [#allocation7], 176
          %v1015 = vld [vmem:[%s1014] sm:$0xf]
          %v1018 = vrot.slane %v1013, 6
          %v1019 = vsel %vm321, %v1012, %v1018
          %v1021 = vmul.f32 %v1015, %v1019
          %v1022 = vadd.f32 %v958, %v1021
          %1023 = vrot.lane.b32.xlu0 %v306, 80
          %v1024 = vpop.permute.xlu0 %1023
          %1025 = vrot.lane.b32.xlu0 %v307, 80
          %v1026 = vpop.permute.xlu0 %1025
          %vm1027 = vcmp.lt.s32.totalorder %v313, 80
          %v1028 = vsel %vm1027, %v1024, %v1026
          %v1029 = vsel %vm1027, %v1026, %v1024
          %s1030 = scalar_lea.vmem [#allocation7], 180
          %v1031 = vld [vmem:[%s1030] sm:$0xf]
          %v1034 = vrot.slane %v1029, 6
          %v1035 = vsel %vm321, %v1028, %v1034
          %v1037 = vmul.f32 %v1031, %v1035
          %v1038 = vadd.f32 %v974, %v1037
          %1039 = vrot.lane.b32.xlu0 %v306, 79
          %v1040 = vpop.permute.xlu0 %1039
          %1041 = vrot.lane.b32.xlu0 %v307, 79
          %v1042 = vpop.permute.xlu0 %1041
          %vm1043 = vcmp.lt.s32.totalorder %v313, 79
          %v1044 = vsel %vm1043, %v1040, %v1042
          %v1045 = vsel %vm1043, %v1042, %v1040
          %s1046 = scalar_lea.vmem [#allocation7], 184
          %v1047 = vld [vmem:[%s1046] sm:$0xf]
          %v1050 = vrot.slane %v1045, 6
          %v1051 = vsel %vm321, %v1044, %v1050
          %v1053 = vmul.f32 %v1047, %v1051
          %v1054 = vadd.f32 %v990, %v1053
          %1055 = vrot.lane.b32.xlu0 %v306, 78
          %v1056 = vpop.permute.xlu0 %1055
          %1057 = vrot.lane.b32.xlu0 %v307, 78
          %v1058 = vpop.permute.xlu0 %1057
          %vm1059 = vcmp.lt.s32.totalorder %v313, 78
          %v1060 = vsel %vm1059, %v1056, %v1058
          %v1061 = vsel %vm1059, %v1058, %v1056
          %s1062 = scalar_lea.vmem [#allocation7], 188
          %v1063 = vld [vmem:[%s1062] sm:$0xf]
          %v1066 = vrot.slane %v1061, 6
          %v1067 = vsel %vm321, %v1060, %v1066
          %v1069 = vmul.f32 %v1063, %v1067
          %v1070 = vadd.f32 %v1006, %v1069
          %1071 = vrot.lane.b32.xlu0 %v306, 77
          %v1072 = vpop.permute.xlu0 %1071
          %1073 = vrot.lane.b32.xlu0 %v307, 77
          %v1074 = vpop.permute.xlu0 %1073
          %vm1075 = vcmp.lt.s32.totalorder %v313, 77
          %v1076 = vsel %vm1075, %v1072, %v1074
          %v1077 = vsel %vm1075, %v1074, %v1072
          %s1078 = scalar_lea.vmem [#allocation7], 192
          %v1079 = vld [vmem:[%s1078] sm:$0xf]
          %v1082 = vrot.slane %v1077, 6
          %v1083 = vsel %vm321, %v1076, %v1082
          %v1085 = vmul.f32 %v1079, %v1083
          %v1086 = vadd.f32 %v1022, %v1085
          %v1087 = vadd.f32 %v1086, %v1038
          %v1088 = vadd.f32 %v1054, %v1070
          %v1089 = vadd.f32 %v1087, %v1088
          %v1091 = vrot.slane %v1089, 7
          %v1092 = vrot.slane %v1091, 2
          %v1094 = vadd.f32 %v1089, %v1092
          %v1095 = vmul.f32 %v1094, 0.5
          %v1096 = vtanh.pop %v1095
          %v1097 = vadd.f32 %v1096, 1.0
          %v1098 = vmul.f32 %v1097, 0.5
          %v1100 = vrot.slane %v1098, 1
          %v1101 = vrot.slane %v1098, 2
          %v1102 = vrot.slane %v1098, 3
          %v1103 = vsel %vm305, %v1098, %v1100
          %vm1104 = vcmask 1042434
          %v1105 = vsel %vm1104, %v1101, %v1102
          %v1106 = vsel %vm321, %v1103, %v1105
          %v1108 = vlaneseq
          %vm1109 = vcmp.ge.s32.totalorder %v1108, 0
          %vm1110 = vcmp.lt.s32.totalorder %v1108, 256
          %vm1111 = vmand %vm1109, %vm1110
          %1112 = vst.msk [vmem:[%s197] sm:$0x3] %vm1111, %v1106
        $region48: #{tpu_custom_call.1} parent=27 // pred_fallthru
          _
        %s1113 = sand.u32 %s89, 1
        %s1114 = scalar_lea.sflag [#allocation6], %s1113
        %s1115 = sand.u32 %s89, 1
        %s1116 = smul.addr %s1115, 2
        %s1117 = scalar_lea.vmem [#allocation9], %s1116
        // Predicated region
        $region49: #{tpu_custom_call.1} parent=27 // pred_check
          %p1118 = pneg %p99
        $region50: #{tpu_custom_call.1} parent=27 // pred_check_branch
          %1120 = sbr.rel (%p1118) target = $region52
        $region51: #{tpu_custom_call.1} parent=27 // pred_region
          %1122 = vsyncadd %s1114, 0
          %s1123 = smul.addr %s24, 2
          %s1124 = scalar_lea.hbm %s2, %s1123
          %s1126 = sshll.u32 %s1117, 4
          %s1127 = int_to_ptr.vmem [resolvable:$true] %s1126
          %s1128 = sshll.u32 %s1124, 4
          %s1129 = int_to_ptr.hbm [resolvable:$true] %s1128
          %1131 = dma.vmem_to_hbm [thread:$0]  %s1127, 32, %s1129, %s1114
        $region52: #{tpu_custom_call.1} parent=27 // pred_fallthru
          _
      $region28: #{tpu_custom_call.1} parent=5 // pred_fallthru
        _
      %p1132 = scmp.le.s32.totalorder 2, %s15
      // Predicated region
      $region53: #{tpu_custom_call.1} parent=5 // pred_check
        %p1133 = pneg %p1132
      $region54: #{tpu_custom_call.1} parent=5 // pred_check_branch
        %1135 = sbr.rel (%p1133) target = $region56
      $region55: #{tpu_custom_call.1} parent=5 // pred_region
        %s1136 = ssub.s32 %s15, 2
        // Predicated region
        $region57: #{tpu_custom_call.1} parent=55 // pred_check
          %p1137 = pneg %p105
        $region58: #{tpu_custom_call.1} parent=55 // pred_check_branch
          %1139 = sbr.rel (%p1137) target = $region60
        $region59: #{tpu_custom_call.1} parent=55 // pred_region
          %s1140 = sand.u32 %s90, 1
          %s1141 = scalar_lea.sflag [#allocation6], %s1140
          %s1142 = sand.u32 %s90, 1
          %s1143 = smul.addr %s1142, 2
          %s1144 = scalar_lea.vmem [#allocation9], %s1143
          %1146 = dma.done %s1141, 32
        $region60: #{tpu_custom_call.1} parent=55 // pred_fallthru
          _
      $region56: #{tpu_custom_call.1} parent=5 // pred_fallthru
        _
    $region6: #{tpu_custom_call.1} parent=1 // loop_footer
      %s19 = sadd.s32 1, %s15
    $region7: #{tpu_custom_call.1} parent=1 // loop_footer_branch
      %14 = sbr.rel target = $region3
    $region8: #{tpu_custom_call.1} parent=1 // loop_exit
      _
    %1147 = vsyncpa [#allocation5], 1
    %s1148 = scalar_lea.sflag [#allocation5], 1
    %1149 = vsyncpa %s1148, 1
    %1150 = vsyncpa [#allocation8], 1
    %1151 = vsyncpa [#allocation6], 1
    %s1152 = scalar_lea.sflag [#allocation6], 1
    %1153 = vsyncpa %s1152, 1

</llo_original>
